<compile_context>
chip_gen: v7x
topology: tpu7x:2x2x1
jax: 0.10.0
libtpu: 0.0.40
codegen_flags: <defaults>
</compile_context>

<pallas_src>
import functools

import jax
import jax.numpy as jnp
from jax import lax
from jax.experimental import pallas as pl
from jax.experimental.pallas import tpu as pltpu

# ----- module hyper-parameters (small, consistent with the module) -----
BATCH = 2
SEQ = 8
DIM = 32
N_HEADS = 4
HEAD_DIM = DIM // N_HEADS
EPS = 1e-12        # F.normalize eps
NEG_INF = -1e30    # additive mask value outside the per-head diagonal blocks


# ---------------------------------------------------------------------------
# Single fused kernel: QKV projection + block-diagonal normalized attention +
# raw (C,N)->(N,C) view remap + shared output projection.  No grid.
# ---------------------------------------------------------------------------
def _mha_fused_kernel(x_ref, wqkv_ref, scale_ref, wo_ref, bo_ref, mask_ref,
                      sels_ref, out_ref, *, batch, seq, dim):
    kblk = dim // seq      # number of width-`seq` column blocks in the .view remap

    x = x_ref[...]                                                # (B*N, C)
    qkv = jnp.dot(x, wqkv_ref[...],
                  preferred_element_type=jnp.float32)             # (B*N, 3C)

    scale_vec = scale_ref[...]                                    # (1, C): scale[h] per column
    mask = mask_ref[...]                                          # (C, C): 0 / -1e30

    y_rows = []
    for b in range(batch):                                        # B=2, tiny unrolled loop
        blk = qkv[b * seq:(b + 1) * seq, :]                       # (N, 3C)

        # PyTorch normalizes q/k of shape (d, n) along n (p=2, eps=1e-12); on the
        # un-transposed (N, C) views that is per-column normalization, identical head-wise,
        # so do it once on the joint (N, 2C) q|k tile.  x / max(||x||, eps) ==
        # x * rsqrt(max(||x||^2, eps^2))  (EUP rsqrt).
        qk = blk[:, :2 * dim]                                     # (N, 2C)
        qk = qk * lax.rsqrt(
            jnp.maximum(jnp.sum(qk * qk, axis=0, keepdims=True), EPS * EPS))
        qn = qk[:, :dim] * scale_vec                              # fold per-head scale into q
        kn = qk[:, dim:]                                          # (N, C)
        v = blk[:, 2 * dim:]                                      # (N, C)

        # Block-diagonal scores: ONE (C,C) matmul holds all H per-head DxD score blocks.
        s = lax.dot_general(kn, qn, (((0,), (0,)), ((), ())),
                            preferred_element_type=jnp.float32)   # (C, C)
        s = s + mask                                              # -1e30 outside head blocks
        s = s - jnp.max(s, axis=-1, keepdims=True)
        p = jnp.exp(s)                                            # off-block -> exp == 0
        # Exact reciprocal (approx=True risks the 1e-4 f32 check, see header note).
        attn = p * pl.reciprocal(jnp.sum(p, axis=-1, keepdims=True), approx=False)

        # ONE matmul: out_cn[h*D+d, n] == (attn_h @ v_h^T)[d, n]   (off-block attn is 0)
        out_cn = lax.dot_general(attn, v, (((1,), (1,)), ((), ())),
                                 preferred_element_type=jnp.float32)   # (C, N)

        # torch .view(b, n, c) raw remap: y[n', a*N + s] = out_cn[n'*kblk + a, s].
        # Host-precomputed selector matmuls do the strided row selection on the MXU;
        # a lane-concat assembles the remapped (N, C) tile.
        g = [jnp.dot(sels_ref[a], out_cn, preferred_element_type=jnp.float32)
             for a in range(kblk)]                                # kblk x (N, N)
        y_rows.append(jnp.concatenate(g, axis=1))                 # (N, C)

    # Shared to_out projection over the whole batch in one matmul.
    y = jnp.concatenate(y_rows, axis=0)                           # (B*N, C)
    out = jnp.dot(y, wo_ref[...], preferred_element_type=jnp.float32) + bo_ref[...]
    # Single store; (16, 32) uses 32/128 lanes (masked vst) - negligible at this size.
    out_ref[...] = out.astype(out_ref.dtype)


# ---------------------------------------------------------------------------
# One-time (init) weight fusion + constant construction.  Keep OUT of the
# per-call path (review point: hoist preprocessing, then jit the call).
# ---------------------------------------------------------------------------
def prepare_mha_params(wq, wk, wv, scale, wo, bo, *, seq, n_heads):
    dim = wq.shape[0]
    assert dim % n_heads == 0
    # The fused .view remap requires seq | dim (holds for this module's shapes).
    assert dim % seq == 0
    head_dim = dim // n_heads
    kblk = dim // seq

    wqkv = jnp.concatenate([wq, wk, wv], axis=1).astype(jnp.float32)       # (C, 3C)
    scale_vec = jnp.repeat(scale.reshape(n_heads).astype(jnp.float32),
                           head_dim).reshape(1, dim)                        # (1, C)
    bo2 = bo.reshape(1, dim).astype(jnp.float32)                            # (1, C)

    # Additive softmax mask: 0 inside per-head DxD diagonal blocks, -1e30 outside.
    idx = jnp.arange(dim)
    same_head = (idx[:, None] // head_dim) == (idx[None, :] // head_dim)
    mask = jnp.where(same_head, 0.0, NEG_INF).astype(jnp.float32)           # (C, C)

    # Selector matrices for the .view remap: Sel[a, n, j] = (j == kblk*n + a).
    rows = jnp.arange(seq)
    cols = jnp.arange(dim)
    a_idx = jnp.arange(kblk)
    sels = (cols[None, None, :] ==
            (kblk * rows[None, :, None] + a_idx[:, None, None])
            ).astype(jnp.float32)                                           # (kblk, N, C)

    return dict(wqkv=wqkv, scale_vec=scale_vec, wo=wo.astype(jnp.float32),
                bo2=bo2, mask=mask, sels=sels)


@jax.jit
def multi_head_attention(x, wqkv, scale_vec, wo, bo2, mask, sels):
    B, N, C = x.shape
    kblk = C // N

    kernel = functools.partial(_mha_fused_kernel, batch=B, seq=N, dim=C)

    flops = (2 * B * N * C * 3 * C          # fused QKV projection
             + B * 2 * C * C * N            # block-diagonal scores
             + B * 2 * C * C * N            # attn @ v
             + B * kblk * 2 * N * C * N     # .view selector matmuls
             + 2 * B * N * C * C)           # output projection
    transcendentals = B * C * C + B * 2 * C + B * C      # exp + rsqrt + reciprocal
    bytes_accessed = 4 * (B * N * C + C * 3 * C + C + C * C + C
                          + C * C + kblk * N * C + B * N * C)

    out_flat = pl.pallas_call(
        kernel,
        out_shape=jax.ShapeDtypeStruct((B * N, C), jnp.float32),
        in_specs=[pl.BlockSpec(memory_space=pltpu.MemorySpace.VMEM)] * 7,
        out_specs=pl.BlockSpec(memory_space=pltpu.MemorySpace.VMEM),
        cost_estimate=pl.CostEstimate(flops=flops,
                                      transcendentals=transcendentals,
                                      bytes_accessed=bytes_accessed),
    )(x.reshape(B * N, C), wqkv, scale_vec, wo, bo2, mask, sels)

    return out_flat.reshape(B, N, C)


# ---------------------------------------------------------------------------
# Pure-JAX reference (mirrors the PyTorch forward exactly).
# ---------------------------------------------------------------------------
def ref_forward(x, wq, wk, wv, scale, wo, bo):
    B, N, C = x.shape
    H, D = N_HEADS, HEAD_DIM
    hp = lax.Precision.HIGHEST

    def split(t):  # 'b n (h d) -> b h n d'
        return jnp.transpose(t.reshape(B, N, H, D), (0, 2, 1, 3))

    q = split(jnp.dot(x, wq, precision=hp))
    k = split(jnp.dot(x, wk, precision=hp))
    v = split(jnp.dot(x, wv, precision=hp))

    q = jnp.swapaxes(q, -2, -1)  # (B, H, D, N)
    k = jnp.swapaxes(k, -2, -1)
    v = jnp.swapaxes(v, -2, -1)

    def l2norm(t):
        nrm = jnp.sqrt(jnp.sum(t * t, axis=-1, keepdims=True))
        return t / jnp.maximum(nrm, EPS)

    q = l2norm(q)
    k = l2norm(k)

    attn = jnp.einsum('bhin,bhjn->bhij', k, q, precision=hp)     # (B, H, D, D)
    attn = attn * scale[None]                                    # scale: (H, 1, 1)
    attn = jax.nn.softmax(attn, axis=-1)
    out = jnp.einsum('bhij,bhjm->bhim', attn, v, precision=hp)   # (B, H, D, N)
    out = out.reshape(B, N, C)                                   # torch .view(b, n, c)
    return jnp.dot(out, wo, precision=hp) + bo


if __name__ == "__main__":
    key = jax.random.PRNGKey(0)
    kx, kq, kk, kv, ks, ko, kb = jax.random.split(key, 7)

    x = jax.random.normal(kx, (BATCH, SEQ, DIM), jnp.float32)
    wq = jax.random.normal(kq, (DIM, DIM), jnp.float32) * 0.1
    wk = jax.random.normal(kk, (DIM, DIM), jnp.float32) * 0.1
    wv = jax.random.normal(kv, (DIM, DIM), jnp.float32) * 0.1
    # nn.Parameter(torch.ones(n_heads, 1, 1)) — same shape, deterministic values
    scale = 1.0 + 0.5 * jax.random.normal(ks, (N_HEADS, 1, 1), jnp.float32)
    wo = jax.random.normal(ko, (DIM, DIM), jnp.float32) * 0.1
    bo = jax.random.normal(kb, (DIM,), jnp.float32) * 0.1

    # Init-time weight fusion / constants (hoisted out of the per-call path).
    params = prepare_mha_params(wq, wk, wv, scale, wo, bo, seq=SEQ, n_heads=N_HEADS)

    out = multi_head_attention(x, params["wqkv"], params["scale_vec"], params["wo"],
                               params["bo2"], params["mask"], params["sels"])
    out = jax.block_until_ready(out)

    ref = ref_forward(x, wq, wk, wv, scale, wo, bo)
    assert out.shape == (BATCH, SEQ, DIM)
    assert jnp.allclose(out, ref, rtol=1e-4, atol=1e-4), (
        f"max abs err = {jnp.max(jnp.abs(out - ref))}")

    print("KERNEL_OK")
</pallas_src>

<mosaic_0001>
module attributes {stable_mosaic.version = 11 : i64} {
  func.func @_mha_fused_kernel(%arg0: memref<16x32xf32, #tpu.memory_space<vmem>>, %arg1: memref<32x96xf32, #tpu.memory_space<vmem>>, %arg2: memref<1x32xf32, #tpu.memory_space<vmem>>, %arg3: memref<32x32xf32, #tpu.memory_space<vmem>>, %arg4: memref<1x32xf32, #tpu.memory_space<vmem>>, %arg5: memref<32x32xf32, #tpu.memory_space<vmem>>, %arg6: memref<4x8x32xf32, #tpu.memory_space<vmem>>, %arg7: memref<16x32xf32, #tpu.memory_space<vmem>>) attributes {dimension_semantics = [], scalar_prefetch = 0 : i64, scratch_operands = 0 : i64, tpu.core_type = #tpu.core_type<tc>} {
    %c0 = arith.constant 0 : index
    %c0_0 = arith.constant 0 : index
    %0 = vector.load %arg0[%c0, %c0_0] : memref<16x32xf32, #tpu.memory_space<vmem>>, vector<16x32xf32>
    %c0_1 = arith.constant 0 : index
    %c0_2 = arith.constant 0 : index
    %1 = vector.load %arg1[%c0_1, %c0_2] : memref<32x96xf32, #tpu.memory_space<vmem>>, vector<32x96xf32>
    %cst = arith.constant dense<0.000000e+00> : vector<16x96xf32>
    %2 = tpu.matmul %0, %1, %cst {dimension_numbers = #tpu.dot_dimension_numbers<[1], [0], [0], [1], [0, 0, 1, 1], [], []>} : vector<16x32xf32>, vector<32x96xf32>, vector<16x96xf32> -> vector<16x96xf32>
    %c0_3 = arith.constant 0 : index
    %c0_4 = arith.constant 0 : index
    %3 = vector.load %arg2[%c0_3, %c0_4] : memref<1x32xf32, #tpu.memory_space<vmem>>, vector<1x32xf32>
    %c0_5 = arith.constant 0 : index
    %c0_6 = arith.constant 0 : index
    %4 = vector.load %arg5[%c0_5, %c0_6] : memref<32x32xf32, #tpu.memory_space<vmem>>, vector<32x32xf32>
    %5 = vector.extract_strided_slice %2 {offsets = [0, 0], sizes = [8, 96], strides = [1, 1]} : vector<16x96xf32> to vector<8x96xf32>
    %6 = vector.extract_strided_slice %5 {offsets = [0, 0], sizes = [8, 64], strides = [1, 1]} : vector<8x96xf32> to vector<8x64xf32>
    %7 = arith.mulf %6, %6 : vector<8x64xf32>
    %cst_7 = arith.constant dense<0.000000e+00> : vector<64xf32>
    %8 = vector.multi_reduction <add>, %7, %cst_7 [0] : vector<8x64xf32> to vector<64xf32>
    %9 = vector.shape_cast %8 : vector<64xf32> to vector<1x64xf32>
    %cst_8 = arith.constant 1.000000e-24 : f32
    %10 = vector.broadcast %cst_8 : f32 to vector<1x64xf32>
    %11 = arith.maximumf %9, %10 : vector<1x64xf32>
    %12 = math.rsqrt %11 : vector<1x64xf32>
    %13 = vector.broadcast %12 : vector<1x64xf32> to vector<8x64xf32>
    %14 = arith.mulf %6, %13 : vector<8x64xf32>
    %15 = vector.extract_strided_slice %14 {offsets = [0, 0], sizes = [8, 32], strides = [1, 1]} : vector<8x64xf32> to vector<8x32xf32>
    %16 = vector.broadcast %3 : vector<1x32xf32> to vector<8x32xf32>
    %17 = arith.mulf %15, %16 : vector<8x32xf32>
    %18 = vector.extract_strided_slice %14 {offsets = [0, 32], sizes = [8, 32], strides = [1, 1]} : vector<8x64xf32> to vector<8x32xf32>
    %19 = vector.extract_strided_slice %5 {offsets = [0, 64], sizes = [8, 32], strides = [1, 1]} : vector<8x96xf32> to vector<8x32xf32>
    %cst_9 = arith.constant dense<0.000000e+00> : vector<32x32xf32>
    %20 = tpu.matmul %18, %17, %cst_9 {dimension_numbers = #tpu.dot_dimension_numbers<[0], [0], [1], [1], [0, 1, 1, 1], [], []>} : vector<8x32xf32>, vector<8x32xf32>, vector<32x32xf32> -> vector<32x32xf32>
    %21 = arith.addf %20, %4 : vector<32x32xf32>
    %cst_10 = arith.constant dense<0xFF800000> : vector<32xf32>
    %22 = vector.multi_reduction <maximumf>, %21, %cst_10 [1] : vector<32x32xf32> to vector<32xf32>
    %23 = vector.shape_cast %22 : vector<32xf32> to vector<32x1xf32>
    %24 = vector.broadcast %23 : vector<32x1xf32> to vector<32x32xf32>
    %25 = arith.subf %21, %24 : vector<32x32xf32>
    %26 = math.exp %25 : vector<32x32xf32>
    %cst_11 = arith.constant dense<0.000000e+00> : vector<32xf32>
    %27 = vector.multi_reduction <add>, %26, %cst_11 [1] : vector<32x32xf32> to vector<32xf32>
    %28 = vector.shape_cast %27 : vector<32xf32> to vector<32x1xf32>
    %29 = tpu.reciprocal %28 : vector<32x1xf32> -> vector<32x1xf32>
    %30 = vector.broadcast %29 : vector<32x1xf32> to vector<32x32xf32>
    %31 = arith.mulf %26, %30 : vector<32x32xf32>
    %cst_12 = arith.constant dense<0.000000e+00> : vector<32x8xf32>
    %32 = tpu.matmul %31, %19, %cst_12 {dimension_numbers = #tpu.dot_dimension_numbers<[1], [1], [0], [0], [0, 0, 1, 0], [], []>} : vector<32x32xf32>, vector<8x32xf32>, vector<32x8xf32> -> vector<32x8xf32>
    %c0_13 = arith.constant 0 : index
    %c0_14 = arith.constant 0 : index
    %c0_15 = arith.constant 0 : index
    %33 = vector.load %arg6[%c0_13, %c0_14, %c0_15] : memref<4x8x32xf32, #tpu.memory_space<vmem>>, vector<1x8x32xf32>
    %34 = vector.shape_cast %33 : vector<1x8x32xf32> to vector<8x32xf32>
    %cst_16 = arith.constant dense<0.000000e+00> : vector<8x8xf32>
    %35 = tpu.matmul %34, %32, %cst_16 {dimension_numbers = #tpu.dot_dimension_numbers<[1], [0], [0], [1], [0, 0, 1, 1], [], []>} : vector<8x32xf32>, vector<32x8xf32>, vector<8x8xf32> -> vector<8x8xf32>
    %c1 = arith.constant 1 : index
    %c0_17 = arith.constant 0 : index
    %c0_18 = arith.constant 0 : index
    %36 = vector.load %arg6[%c1, %c0_17, %c0_18] : memref<4x8x32xf32, #tpu.memory_space<vmem>>, vector<1x8x32xf32>
    %37 = vector.shape_cast %36 : vector<1x8x32xf32> to vector<8x32xf32>
    %cst_19 = arith.constant dense<0.000000e+00> : vector<8x8xf32>
    %38 = tpu.matmul %37, %32, %cst_19 {dimension_numbers = #tpu.dot_dimension_numbers<[1], [0], [0], [1], [0, 0, 1, 1], [], []>} : vector<8x32xf32>, vector<32x8xf32>, vector<8x8xf32> -> vector<8x8xf32>
    %c2 = arith.constant 2 : index
    %c0_20 = arith.constant 0 : index
    %c0_21 = arith.constant 0 : index
    %39 = vector.load %arg6[%c2, %c0_20, %c0_21] : memref<4x8x32xf32, #tpu.memory_space<vmem>>, vector<1x8x32xf32>
    %40 = vector.shape_cast %39 : vector<1x8x32xf32> to vector<8x32xf32>
    %cst_22 = arith.constant dense<0.000000e+00> : vector<8x8xf32>
    %41 = tpu.matmul %40, %32, %cst_22 {dimension_numbers = #tpu.dot_dimension_numbers<[1], [0], [0], [1], [0, 0, 1, 1], [], []>} : vector<8x32xf32>, vector<32x8xf32>, vector<8x8xf32> -> vector<8x8xf32>
    %c3 = arith.constant 3 : index
    %c0_23 = arith.constant 0 : index
    %c0_24 = arith.constant 0 : index
    %42 = vector.load %arg6[%c3, %c0_23, %c0_24] : memref<4x8x32xf32, #tpu.memory_space<vmem>>, vector<1x8x32xf32>
    %43 = vector.shape_cast %42 : vector<1x8x32xf32> to vector<8x32xf32>
    %cst_25 = arith.constant dense<0.000000e+00> : vector<8x8xf32>
    %44 = tpu.matmul %43, %32, %cst_25 {dimension_numbers = #tpu.dot_dimension_numbers<[1], [0], [0], [1], [0, 0, 1, 1], [], []>} : vector<8x32xf32>, vector<32x8xf32>, vector<8x8xf32> -> vector<8x8xf32>
    %45 = tpu.concatenate %35, %38, %41, %44 in 1 : vector<8x8xf32>, vector<8x8xf32>, vector<8x8xf32>, vector<8x8xf32> -> vector<8x32xf32>
    %46 = vector.extract_strided_slice %2 {offsets = [8, 0], sizes = [8, 96], strides = [1, 1]} : vector<16x96xf32> to vector<8x96xf32>
    %47 = vector.extract_strided_slice %46 {offsets = [0, 0], sizes = [8, 64], strides = [1, 1]} : vector<8x96xf32> to vector<8x64xf32>
    %48 = arith.mulf %47, %47 : vector<8x64xf32>
    %cst_26 = arith.constant dense<0.000000e+00> : vector<64xf32>
    %49 = vector.multi_reduction <add>, %48, %cst_26 [0] : vector<8x64xf32> to vector<64xf32>
    %50 = vector.shape_cast %49 : vector<64xf32> to vector<1x64xf32>
    %cst_27 = arith.constant 1.000000e-24 : f32
    %51 = vector.broadcast %cst_27 : f32 to vector<1x64xf32>
    %52 = arith.maximumf %50, %51 : vector<1x64xf32>
    %53 = math.rsqrt %52 : vector<1x64xf32>
    %54 = vector.broadcast %53 : vector<1x64xf32> to vector<8x64xf32>
    %55 = arith.mulf %47, %54 : vector<8x64xf32>
    %56 = vector.extract_strided_slice %55 {offsets = [0, 0], sizes = [8, 32], strides = [1, 1]} : vector<8x64xf32> to vector<8x32xf32>
    %57 = vector.broadcast %3 : vector<1x32xf32> to vector<8x32xf32>
    %58 = arith.mulf %56, %57 : vector<8x32xf32>
    %59 = vector.extract_strided_slice %55 {offsets = [0, 32], sizes = [8, 32], strides = [1, 1]} : vector<8x64xf32> to vector<8x32xf32>
    %60 = vector.extract_strided_slice %46 {offsets = [0, 64], sizes = [8, 32], strides = [1, 1]} : vector<8x96xf32> to vector<8x32xf32>
    %cst_28 = arith.constant dense<0.000000e+00> : vector<32x32xf32>
    %61 = tpu.matmul %59, %58, %cst_28 {dimension_numbers = #tpu.dot_dimension_numbers<[0], [0], [1], [1], [0, 1, 1, 1], [], []>} : vector<8x32xf32>, vector<8x32xf32>, vector<32x32xf32> -> vector<32x32xf32>
    %62 = arith.addf %61, %4 : vector<32x32xf32>
    %cst_29 = arith.constant dense<0xFF800000> : vector<32xf32>
    %63 = vector.multi_reduction <maximumf>, %62, %cst_29 [1] : vector<32x32xf32> to vector<32xf32>
    %64 = vector.shape_cast %63 : vector<32xf32> to vector<32x1xf32>
    %65 = vector.broadcast %64 : vector<32x1xf32> to vector<32x32xf32>
    %66 = arith.subf %62, %65 : vector<32x32xf32>
    %67 = math.exp %66 : vector<32x32xf32>
    %cst_30 = arith.constant dense<0.000000e+00> : vector<32xf32>
    %68 = vector.multi_reduction <add>, %67, %cst_30 [1] : vector<32x32xf32> to vector<32xf32>
    %69 = vector.shape_cast %68 : vector<32xf32> to vector<32x1xf32>
    %70 = tpu.reciprocal %69 : vector<32x1xf32> -> vector<32x1xf32>
    %71 = vector.broadcast %70 : vector<32x1xf32> to vector<32x32xf32>
    %72 = arith.mulf %67, %71 : vector<32x32xf32>
    %cst_31 = arith.constant dense<0.000000e+00> : vector<32x8xf32>
    %73 = tpu.matmul %72, %60, %cst_31 {dimension_numbers = #tpu.dot_dimension_numbers<[1], [1], [0], [0], [0, 0, 1, 0], [], []>} : vector<32x32xf32>, vector<8x32xf32>, vector<32x8xf32> -> vector<32x8xf32>
    %c0_32 = arith.constant 0 : index
    %c0_33 = arith.constant 0 : index
    %c0_34 = arith.constant 0 : index
    %74 = vector.load %arg6[%c0_32, %c0_33, %c0_34] : memref<4x8x32xf32, #tpu.memory_space<vmem>>, vector<1x8x32xf32>
    %75 = vector.shape_cast %74 : vector<1x8x32xf32> to vector<8x32xf32>
    %cst_35 = arith.constant dense<0.000000e+00> : vector<8x8xf32>
    %76 = tpu.matmul %75, %73, %cst_35 {dimension_numbers = #tpu.dot_dimension_numbers<[1], [0], [0], [1], [0, 0, 1, 1], [], []>} : vector<8x32xf32>, vector<32x8xf32>, vector<8x8xf32> -> vector<8x8xf32>
    %c1_36 = arith.constant 1 : index
    %c0_37 = arith.constant 0 : index
    %c0_38 = arith.constant 0 : index
    %77 = vector.load %arg6[%c1_36, %c0_37, %c0_38] : memref<4x8x32xf32, #tpu.memory_space<vmem>>, vector<1x8x32xf32>
    %78 = vector.shape_cast %77 : vector<1x8x32xf32> to vector<8x32xf32>
    %cst_39 = arith.constant dense<0.000000e+00> : vector<8x8xf32>
    %79 = tpu.matmul %78, %73, %cst_39 {dimension_numbers = #tpu.dot_dimension_numbers<[1], [0], [0], [1], [0, 0, 1, 1], [], []>} : vector<8x32xf32>, vector<32x8xf32>, vector<8x8xf32> -> vector<8x8xf32>
    %c2_40 = arith.constant 2 : index
    %c0_41 = arith.constant 0 : index
    %c0_42 = arith.constant 0 : index
    %80 = vector.load %arg6[%c2_40, %c0_41, %c0_42] : memref<4x8x32xf32, #tpu.memory_space<vmem>>, vector<1x8x32xf32>
    %81 = vector.shape_cast %80 : vector<1x8x32xf32> to vector<8x32xf32>
    %cst_43 = arith.constant dense<0.000000e+00> : vector<8x8xf32>
    %82 = tpu.matmul %81, %73, %cst_43 {dimension_numbers = #tpu.dot_dimension_numbers<[1], [0], [0], [1], [0, 0, 1, 1], [], []>} : vector<8x32xf32>, vector<32x8xf32>, vector<8x8xf32> -> vector<8x8xf32>
    %c3_44 = arith.constant 3 : index
    %c0_45 = arith.constant 0 : index
    %c0_46 = arith.constant 0 : index
    %83 = vector.load %arg6[%c3_44, %c0_45, %c0_46] : memref<4x8x32xf32, #tpu.memory_space<vmem>>, vector<1x8x32xf32>
    %84 = vector.shape_cast %83 : vector<1x8x32xf32> to vector<8x32xf32>
    %cst_47 = arith.constant dense<0.000000e+00> : vector<8x8xf32>
    %85 = tpu.matmul %84, %73, %cst_47 {dimension_numbers = #tpu.dot_dimension_numbers<[1], [0], [0], [1], [0, 0, 1, 1], [], []>} : vector<8x32xf32>, vector<32x8xf32>, vector<8x8xf32> -> vector<8x8xf32>
    %86 = tpu.concatenate %76, %79, %82, %85 in 1 : vector<8x8xf32>, vector<8x8xf32>, vector<8x8xf32>, vector<8x8xf32> -> vector<8x32xf32>
    %87 = tpu.concatenate %45, %86 in 0 : vector<8x32xf32>, vector<8x32xf32> -> vector<16x32xf32>
    %c0_48 = arith.constant 0 : index
    %c0_49 = arith.constant 0 : index
    %88 = vector.load %arg3[%c0_48, %c0_49] : memref<32x32xf32, #tpu.memory_space<vmem>>, vector<32x32xf32>
    %cst_50 = arith.constant dense<0.000000e+00> : vector<16x32xf32>
    %89 = tpu.matmul %87, %88, %cst_50 {dimension_numbers = #tpu.dot_dimension_numbers<[1], [0], [0], [1], [0, 0, 1, 1], [], []>} : vector<16x32xf32>, vector<32x32xf32>, vector<16x32xf32> -> vector<16x32xf32>
    %c0_51 = arith.constant 0 : index
    %c0_52 = arith.constant 0 : index
    %90 = vector.load %arg4[%c0_51, %c0_52] : memref<1x32xf32, #tpu.memory_space<vmem>>, vector<1x32xf32>
    %91 = vector.broadcast %90 : vector<1x32xf32> to vector<16x32xf32>
    %92 = arith.addf %89, %91 : vector<16x32xf32>
    %c0_53 = arith.constant 0 : index
    %c0_54 = arith.constant 0 : index
    %93 = vector.load %arg7[%c0_53, %c0_54] : memref<16x32xf32, #tpu.memory_space<vmem>>, vector<16x32xf32>
    tpu.vector_store %arg7[%c0_53, %c0_54], %92 {strides = array<i32>} : memref<16x32xf32, #tpu.memory_space<vmem>>, vector<16x32xf32>,
    return
  }
}

</mosaic_0001>

<llo_original>
// kernel: multi_head_attention.1
$region0: #{multi_head_attention.1}
  #allocation0 [shape = 'u32[]', space=smem, size = 0x4, offset = 0x4, fixed_abs, tag = 'smem constant byte address 0x4 - core index']
  #allocation1 [shape = 'u32[144,128]{1,0:T(1,128)}', space=vmem, size = 0x12000, scoped, tag = 'internal scratch']
  %s0 = inlined_call_operand.hbm [shape: f32[16,32], index: 0, kind: input, shape index: {}]
  %s1 = inlined_call_operand.hbm [shape: f32[32,96], index: 1, kind: input, shape index: {}]
  %s2 = inlined_call_operand.vmem [shape: f32[1,32], index: 2, kind: input, shape index: {}]
  %s3 = inlined_call_operand.hbm [shape: f32[32,32], index: 3, kind: input, shape index: {}]
  %s4 = inlined_call_operand.vmem [shape: f32[1,32], index: 4, kind: input, shape index: {}]
  %s5 = inlined_call_operand.hbm [shape: f32[32,32], index: 5, kind: input, shape index: {}]
  %s6 = inlined_call_operand.hbm [shape: f32[4,8,32], index: 6, kind: input, shape index: {}]
  %s7 = inlined_call_operand.hbm [shape: f32[16,32], index: 7, kind: output, shape index: {}]
  %s8 = sld [smem:[#allocation0]]
  $region58: #{multi_head_attention.1} parent=0
    _
  %s10 = ssub.s32 1, %s8
  %s11 = scalar_select 0, %s10, %s8
  $region1: #{multi_head_attention.1} parent=0
    #allocation2 [shape = 'u8[8192]{0}', space=vmem, size = 0x2000, scoped, tag = 'input window, operand 0, single buffered']
    #allocation3 [shape = 's32[1]{0}', space=sflag, size = 0x4, scoped, tag = 'scoped memory for multi_head_attention.1']
    #allocation4 [shape = 's32[1]{0}', space=sflag, size = 0x4, scoped, tag = 'scoped memory for multi_head_attention.1']
    #allocation5 [shape = 'u8[16384]{0}', space=vmem, size = 0x4000, scoped, tag = 'input window, operand 1, single buffered']
    #allocation6 [shape = 's32[1]{0}', space=sflag, size = 0x4, scoped, tag = 'scoped memory for multi_head_attention.1']
    #allocation7 [shape = 'u8[16384]{0}', space=vmem, size = 0x4000, scoped, tag = 'input window, operand 3, single buffered']
    #allocation8 [shape = 'u8[16384]{0}', space=vmem, size = 0x4000, scoped, tag = 'input window, operand 5, single buffered']
    #allocation9 [shape = 's32[1]{0}', space=sflag, size = 0x4, scoped, tag = 'scoped memory for multi_head_attention.1']
    #allocation10 [shape = 'u8[16384]{0}', space=vmem, size = 0x4000, scoped, tag = 'input window, operand 6, single buffered']
    #allocation11 [shape = 'u8[8192]{0}', space=vmem, size = 0x2000, scoped, tag = 'output window, operand 0, single buffered']
    %12 = vsyncpa [#allocation3], 0
    %13 = vsyncpa [#allocation6], 0
    %14 = vsyncpa [#allocation9], 0
    %15 = vsyncpa [#allocation4], 0
    // Predicated region
    $region2: #{multi_head_attention.1} parent=1 // pred_check
      _
    $region3: #{multi_head_attention.1} parent=1 // pred_check_branch
      %17 = sbr.rel (0) target = $region5
    $region4: #{multi_head_attention.1} parent=1 // pred_region
      %s19 = ssub.s32 256, 256
      %20 = vsyncadd [#allocation3], %s19
      %s21 = sshll.u32 [#allocation2], 4
      %s22 = int_to_ptr.vmem [resolvable:$true] %s21
      %27 = dma.hbm_to_vmem [thread:$0]  %s0, 256, %s22, [#allocation3], 128, 128, 8
    $region5: #{multi_head_attention.1} parent=1 // pred_fallthru
      _
    // Predicated region
    $region6: #{multi_head_attention.1} parent=1 // pred_check
      _
    $region7: #{multi_head_attention.1} parent=1 // pred_check_branch
      %29 = sbr.rel (0) target = $region9
    $region8: #{multi_head_attention.1} parent=1 // pred_region
      %s31 = ssub.s32 512, 512
      %32 = vsyncadd [#allocation6], %s31
      %s33 = sshll.u32 [#allocation5], 4
      %s34 = int_to_ptr.vmem [resolvable:$true] %s33
      %39 = dma.hbm_to_vmem [thread:$0]  %s1, 512, %s34, [#allocation6], 128, 128, 8
    $region9: #{multi_head_attention.1} parent=1 // pred_fallthru
      _
    // Predicated region
    $region10: #{multi_head_attention.1} parent=1 // pred_check
      _
    $region11: #{multi_head_attention.1} parent=1 // pred_check_branch
      %41 = sbr.rel (0) target = $region13
    $region12: #{multi_head_attention.1} parent=1 // pred_region
      _
    $region13: #{multi_head_attention.1} parent=1 // pred_fallthru
      _
    // Predicated region
    $region14: #{multi_head_attention.1} parent=1 // pred_check
      _
    $region15: #{multi_head_attention.1} parent=1 // pred_check_branch
      %43 = sbr.rel (0) target = $region17
    $region16: #{multi_head_attention.1} parent=1 // pred_region
      %s45 = ssub.s32 512, 512
      %46 = vsyncadd [#allocation6], %s45
      %s47 = sshll.u32 [#allocation7], 4
      %s48 = int_to_ptr.vmem [resolvable:$true] %s47
      %53 = dma.hbm_to_vmem [thread:$0]  %s3, 512, %s48, [#allocation6], 128, 128, 8
    $region17: #{multi_head_attention.1} parent=1 // pred_fallthru
      _
    // Predicated region
    $region18: #{multi_head_attention.1} parent=1 // pred_check
      _
    $region19: #{multi_head_attention.1} parent=1 // pred_check_branch
      %55 = sbr.rel (0) target = $region21
    $region20: #{multi_head_attention.1} parent=1 // pred_region
      _
    $region21: #{multi_head_attention.1} parent=1 // pred_fallthru
      _
    // Predicated region
    $region22: #{multi_head_attention.1} parent=1 // pred_check
      _
    $region23: #{multi_head_attention.1} parent=1 // pred_check_branch
      %57 = sbr.rel (0) target = $region25
    $region24: #{multi_head_attention.1} parent=1 // pred_region
      %s59 = ssub.s32 512, 512
      %60 = vsyncadd [#allocation9], %s59
      %s61 = sshll.u32 [#allocation8], 4
      %s62 = int_to_ptr.vmem [resolvable:$true] %s61
      %67 = dma.hbm_to_vmem [thread:$0]  %s5, 512, %s62, [#allocation9], 128, 128, 8
    $region25: #{multi_head_attention.1} parent=1 // pred_fallthru
      _
    // Predicated region
    $region26: #{multi_head_attention.1} parent=1 // pred_check
      _
    $region27: #{multi_head_attention.1} parent=1 // pred_check_branch
      %69 = sbr.rel (0) target = $region29
    $region28: #{multi_head_attention.1} parent=1 // pred_region
      %s71 = ssub.s32 512, 512
      %72 = vsyncadd [#allocation9], %s71
      %s73 = sshll.u32 [#allocation10], 4
      %s74 = int_to_ptr.vmem [resolvable:$true] %s73
      %79 = dma.hbm_to_vmem [thread:$0]  %s6, 512, %s74, [#allocation9], 128, 128, 8
    $region29: #{multi_head_attention.1} parent=1 // pred_fallthru
      _
    // Predicated region
    $region30: #{multi_head_attention.1} parent=1 // pred_check
      _
    $region31: #{multi_head_attention.1} parent=1 // pred_check_branch
      %81 = sbr.rel (0) target = $region33
    $region32: #{multi_head_attention.1} parent=1 // pred_region
      %82 = dma.done [#allocation3], 256
    $region33: #{multi_head_attention.1} parent=1 // pred_fallthru
      _
    // Predicated region
    $region34: #{multi_head_attention.1} parent=1 // pred_check
      _
    $region35: #{multi_head_attention.1} parent=1 // pred_check_branch
      %84 = sbr.rel (0) target = $region37
    $region36: #{multi_head_attention.1} parent=1 // pred_region
      %85 = dma.done [#allocation6], 512
    $region37: #{multi_head_attention.1} parent=1 // pred_fallthru
      _
    // Predicated region
    $region38: #{multi_head_attention.1} parent=1 // pred_check
      _
    $region39: #{multi_head_attention.1} parent=1 // pred_check_branch
      %87 = sbr.rel (0) target = $region41
    $region40: #{multi_head_attention.1} parent=1 // pred_region
      %88 = dma.done [#allocation6], 512
    $region41: #{multi_head_attention.1} parent=1 // pred_fallthru
      _
    // Predicated region
    $region42: #{multi_head_attention.1} parent=1 // pred_check
      _
    $region43: #{multi_head_attention.1} parent=1 // pred_check_branch
      %90 = sbr.rel (0) target = $region45
    $region44: #{multi_head_attention.1} parent=1 // pred_region
      %91 = dma.done [#allocation9], 512
    $region45: #{multi_head_attention.1} parent=1 // pred_fallthru
      _
    // Predicated region
    $region46: #{multi_head_attention.1} parent=1 // pred_check
      _
    $region47: #{multi_head_attention.1} parent=1 // pred_check_branch
      %93 = sbr.rel (0) target = $region49
    $region48: #{multi_head_attention.1} parent=1 // pred_region
      %94 = dma.done [#allocation9], 512
    $region49: #{multi_head_attention.1} parent=1 // pred_fallthru
      _
    %v95 = vld [vmem:[#allocation2] sm:$0xff]
    %v96 = vld [vmem:[#allocation2 + $0x8] sm:$0xff]
    %v97 = vld [vmem:[#allocation5] sm:$0xff]
    %v98 = vld [vmem:[#allocation5 + $0x8] sm:$0xff]
    %v99 = vld [vmem:[#allocation5 + $0x10] sm:$0xff]
    %v100 = vld [vmem:[#allocation5 + $0x18] sm:$0xff]
    %vm101 = vcmask 261120
    %v103 = vsel %vm101, %v95, 0
    %v106 = vsel %vm101, %v96, 0
    %108 = vmatprep.subr.mxu0 0.0
    %109 = vmatpush1.msra.mxu0 %v97
    %110 = vmatprep.subr.mxu0 0.0
    %111 = vmatpush1.msra.mxu0 %v98
    %112 = vmatprep.subr.mxu0 0.0
    %113 = vmatpush1.msra.mxu0 %v99
    %114 = vmatprep.subr.mxu0 0.0
    %115 = vmatpush1.msra.mxu0 %v100
    %116 = vmatprep.subr.mxu0 0.0
    %117 = vmatpush1.msra.mxu0 0.0
    %118 = vmatprep.subr.mxu0 0.0
    %119 = vmatpush1.msra.mxu0 0.0
    %120 = vmatprep.subr.mxu0 0.0
    %121 = vmatpush1.msra.mxu0 0.0
    %122 = vmatprep.subr.mxu0 0.0
    %123 = vmatpush1.msra.mxu0 0.0
    %124 = vmatprep.subr.mxu0 0.0
    %125 = vmatpush1.msra.mxu0 0.0
    %126 = vmatprep.subr.mxu0 0.0
    %127 = vmatpush1.msra.mxu0 0.0
    %128 = vmatprep.subr.mxu0 0.0
    %129 = vmatpush1.msra.mxu0 0.0
    %130 = vmatprep.subr.mxu0 0.0
    %131 = vmatpush1.msra.mxu0 0.0
    %132 = vmatprep.subr.mxu0 0.0
    %133 = vmatpush1.msra.mxu0 0.0
    %134 = vmatprep.subr.mxu0 0.0
    %135 = vmatpush1.msra.mxu0 0.0
    %136 = vmatprep.subr.mxu0 0.0
    %137 = vmatpush1.msra.mxu0 0.0
    %138 = vmatprep.subr.mxu0 0.0
    %139 = vmatpush1.msra.mxu0 0.0
    %140 = vmatprep.subr.mxu0 0.0
    %141 = vmatpush1.msra.mxu0 0.0
    %142 = vmatprep.subr.mxu0 0.0
    %143 = vmatpush1.msra.mxu0 0.0
    %144 = vmatprep.subr.mxu0 0.0
    %145 = vmatpush1.msra.mxu0 0.0
    %146 = vmatprep.subr.mxu0 0.0
    %147 = vmatpush1.msra.mxu0 0.0
    %148 = vmatprep.subr.mxu0 0.0
    %149 = vmatpush1.msra.mxu0 0.0
    %150 = vmatprep.subr.mxu0 0.0
    %151 = vmatpush1.msra.mxu0 0.0
    %152 = vmatprep.subr.mxu0 0.0
    %153 = vmatpush1.msra.mxu0 0.0
    %154 = vmatprep.subr.mxu0 0.0
    %155 = vmatpush1.msra.mxu0 0.0
    %156 = vmatprep.subr.mxu0 0.0
    %157 = vmatpush1.msra.mxu0 0.0
    %158 = vmatprep.subr.mxu0 0.0
    %159 = vmatpush1.msra.mxu0 0.0
    %160 = vmatprep.subr.mxu0 0.0
    %161 = vmatpush1.msra.mxu0 0.0
    %162 = vmatprep.subr.mxu0 0.0
    %163 = vmatpush1.msra.mxu0 0.0
    %164 = vmatprep.subr.mxu0 0.0
    %165 = vmatpush1.msra.mxu0 0.0
    %166 = vmatprep.subr.mxu0 0.0
    %167 = vmatpush1.msra.mxu0 0.0
    %168 = vmatprep.subr.mxu0 0.0
    %169 = vmatpush1.msra.mxu0 0.0
    %170 = vmatprep.subr.mxu0 0.0
    %171 = vmatpush1.msra.mxu0 0.0
    %172 = vmatprep.mubr.f32.mxu0 0.0
    %173 = vmatmul.mubr.f32.gmra.mrb[0].mxu0 %v103
    %v174 = vpop.f32.mrb[0].mxu0
    %v175 = vadd.f32 0.0, %v174
    %v176 = vpop.f32.mrb[0].mxu0
    %177 = vmatprep.mubr.f32.mxu0 0.0
    %178 = vmatmul.mubr.f32.gmra.mrb[0].mxu0 %v106
    %v179 = vpop.f32.mrb[0].mxu0
    %v180 = vadd.f32 0.0, %v179
    %v181 = vpop.f32.mrb[0].mxu0
    %182 = vdwg.mxu0
    %v183 = vld [vmem:[%s2] sm:$0x1]
    %v184 = vld [vmem:[#allocation8] sm:$0xff]
    %v185 = vld [vmem:[#allocation8 + $0x8] sm:$0xff]
    %v186 = vld [vmem:[#allocation8 + $0x10] sm:$0xff]
    %v187 = vld [vmem:[#allocation8 + $0x18] sm:$0xff]
    %v188 = vmul.f32 %v175, %v175
    %vm189 = vcmask 523264
    %v190 = vsel %vm189, %v188, 0.0
    %v191 = vrot.slane %v190, 4
    %v192 = vadd.f32 %v190, %v191
    %v193 = vrot.slane %v192, 2
    %v194 = vadd.f32 %v192, %v193
    %v195 = vrot.slane %v194, 1
    %v196 = vadd.f32 %v194, %v195
    %v197 = vmax.f32 %v196, 1e-24
    %v198 = vrsqrt.pop %v197
    %v199 = vmul.f32 %v175, %v198
    %v201 = vlaneseq
    %v202 = vshrl.u32 %v201, 7
    %v203 = vsub.s32 0, %v202
    %v204 = vrot.slane %v183, %v203
    %v206 = vmul.f32 %v199, %v204
    %208 = vrot.lane.b32.xlu0 %v199, 96
    %v209 = vpop.permute.xlu0 %208
    %211 = vxpose.xlu0.b32.start [1/16] %v209, 128
    %212 = vxpose.xlu0.b32.cont [2/16] 0.0, 128
    %213 = vxpose.xlu0.b32.cont [3/16] 0.0, 128
    %214 = vxpose.xlu0.b32.cont [4/16] 0.0, 128
    %215 = vxpose.xlu0.b32.cont [5/16] 0.0, 128
    %216 = vxpose.xlu0.b32.cont [6/16] 0.0, 128
    %217 = vxpose.xlu0.b32.cont [7/16] 0.0, 128
    %218 = vxpose.xlu0.b32.cont [8/16] 0.0, 128
    %219 = vxpose.xlu0.b32.cont [9/16] 0.0, 128
    %220 = vxpose.xlu0.b32.cont [10/16] 0.0, 128
    %221 = vxpose.xlu0.b32.cont [11/16] 0.0, 128
    %222 = vxpose.xlu0.b32.cont [12/16] 0.0, 128
    %223 = vxpose.xlu0.b32.cont [13/16] 0.0, 128
    %224 = vxpose.xlu0.b32.cont [14/16] 0.0, 128
    %225 = vxpose.xlu0.b32.cont [15/16] 0.0, 128
    %226 = vxpose.xlu0.b32.end [16/16] 0.0, 128
    %v227 = vpop.trf.xlu0
    %v228 = vpop.trf.xlu0
    %v229 = vpop.trf.xlu0
    %v230 = vpop.trf.xlu0
    %v231 = vpop.trf.xlu0
    %v232 = vpop.trf.xlu0
    %v233 = vpop.trf.xlu0
    %v234 = vpop.trf.xlu0
    %v235 = vpop.trf.xlu0
    %v236 = vpop.trf.xlu0
    %v237 = vpop.trf.xlu0
    %v238 = vpop.trf.xlu0
    %v239 = vpop.trf.xlu0
    %v240 = vpop.trf.xlu0
    %v241 = vpop.trf.xlu0
    %v242 = vpop.trf.xlu0
    %vm243 = vcmask 64512
    %v245 = vsel %vm243, %v227, 0
    %v248 = vsel %vm243, %v228, 0
    %v251 = vsel %vm243, %v229, 0
    %v254 = vsel %vm243, %v230, 0
    %256 = vmatprep.subr.mxu0 0.0
    %257 = vmatpush1.msra.mxu0 %v206
    %258 = vmatprep.subr.mxu0 0.0
    %259 = vmatpush1.msra.mxu0 0.0
    %260 = vmatprep.subr.mxu0 0.0
    %261 = vmatpush1.msra.mxu0 0.0
    %262 = vmatprep.subr.mxu0 0.0
    %263 = vmatpush1.msra.mxu0 0.0
    %264 = vmatprep.subr.mxu0 0.0
    %265 = vmatpush1.msra.mxu0 0.0
    %266 = vmatprep.subr.mxu0 0.0
    %267 = vmatpush1.msra.mxu0 0.0
    %268 = vmatprep.subr.mxu0 0.0
    %269 = vmatpush1.msra.mxu0 0.0
    %270 = vmatprep.subr.mxu0 0.0
    %271 = vmatpush1.msra.mxu0 0.0
    %272 = vmatprep.subr.mxu0 0.0
    %273 = vmatpush1.msra.mxu0 0.0
    %274 = vmatprep.subr.mxu0 0.0
    %275 = vmatpush1.msra.mxu0 0.0
    %276 = vmatprep.subr.mxu0 0.0
    %277 = vmatpush1.msra.mxu0 0.0
    %278 = vmatprep.subr.mxu0 0.0
    %279 = vmatpush1.msra.mxu0 0.0
    %280 = vmatprep.subr.mxu0 0.0
    %281 = vmatpush1.msra.mxu0 0.0
    %282 = vmatprep.subr.mxu0 0.0
    %283 = vmatpush1.msra.mxu0 0.0
    %284 = vmatprep.subr.mxu0 0.0
    %285 = vmatpush1.msra.mxu0 0.0
    %286 = vmatprep.subr.mxu0 0.0
    %287 = vmatpush1.msra.mxu0 0.0
    %288 = vmatprep.subr.mxu0 0.0
    %289 = vmatpush1.msra.mxu0 0.0
    %290 = vmatprep.subr.mxu0 0.0
    %291 = vmatpush1.msra.mxu0 0.0
    %292 = vmatprep.subr.mxu0 0.0
    %293 = vmatpush1.msra.mxu0 0.0
    %294 = vmatprep.subr.mxu0 0.0
    %295 = vmatpush1.msra.mxu0 0.0
    %296 = vmatprep.subr.mxu0 0.0
    %297 = vmatpush1.msra.mxu0 0.0
    %298 = vmatprep.subr.mxu0 0.0
    %299 = vmatpush1.msra.mxu0 0.0
    %300 = vmatprep.subr.mxu0 0.0
    %301 = vmatpush1.msra.mxu0 0.0
    %302 = vmatprep.subr.mxu0 0.0
    %303 = vmatpush1.msra.mxu0 0.0
    %304 = vmatprep.subr.mxu0 0.0
    %305 = vmatpush1.msra.mxu0 0.0
    %306 = vmatprep.subr.mxu0 0.0
    %307 = vmatpush1.msra.mxu0 0.0
    %308 = vmatprep.subr.mxu0 0.0
    %309 = vmatpush1.msra.mxu0 0.0
    %310 = vmatprep.subr.mxu0 0.0
    %311 = vmatpush1.msra.mxu0 0.0
    %312 = vmatprep.subr.mxu0 0.0
    %313 = vmatpush1.msra.mxu0 0.0
    %314 = vmatprep.subr.mxu0 0.0
    %315 = vmatpush1.msra.mxu0 0.0
    %316 = vmatprep.subr.mxu0 0.0
    %317 = vmatpush1.msra.mxu0 0.0
    %318 = vmatprep.subr.mxu0 0.0
    %319 = vmatpush1.msra.mxu0 0.0
    %320 = vmatprep.mubr.f32.mxu0 0.0
    %321 = vmatmul.mubr.f32.gmra.mrb[0].mxu0 %v245
    %v322 = vpop.f32.mrb[0].mxu0
    %v323 = vadd.f32 %v184, %v322
    %v324 = vpop.f32.mrb[0].mxu0
    %325 = vmatprep.mubr.f32.mxu0 0.0
    %326 = vmatmul.mubr.f32.gmra.mrb[0].mxu0 %v248
    %v327 = vpop.f32.mrb[0].mxu0
    %v328 = vadd.f32 %v185, %v327
    %v329 = vpop.f32.mrb[0].mxu0
    %330 = vmatprep.mubr.f32.mxu0 0.0
    %331 = vmatmul.mubr.f32.gmra.mrb[0].mxu0 %v251
    %v332 = vpop.f32.mrb[0].mxu0
    %v333 = vadd.f32 %v186, %v332
    %v334 = vpop.f32.mrb[0].mxu0
    %335 = vmatprep.mubr.f32.mxu0 0.0
    %336 = vmatmul.mubr.f32.gmra.mrb[0].mxu0 %v254
    %v337 = vpop.f32.mrb[0].mxu0
    %v338 = vadd.f32 %v187, %v337
    %v339 = vpop.f32.mrb[0].mxu0
    %340 = vdwg.mxu0
    %v341 = vsel %vm101, %v323, -inf
    %342 = vmax.xlane.f32.xlu0 %v341
    %v343 = vpop.xlane.xlu0 %342
    %v344 = vsel %vm101, %v328, -inf
    %345 = vmax.xlane.f32.xlu0 %v344
    %v346 = vpop.xlane.xlu0 %345
    %v347 = vsel %vm101, %v333, -inf
    %348 = vmax.xlane.f32.xlu0 %v347
    %v349 = vpop.xlane.xlu0 %348
    %v350 = vsel %vm101, %v338, -inf
    %351 = vmax.xlane.f32.xlu0 %v350
    %v352 = vpop.xlane.xlu0 %351
    %v353 = vsub.f32 %v323, %v343
    %v354 = vsub.f32 %v328, %v346
    %v355 = vsub.f32 %v333, %v349
    %v356 = vsub.f32 %v338, %v352
    %v357 = vmul.f32 %v353, 1.442695
    %v358 = vpow.pop %v357
    %v359 = vmul.f32 %v354, 1.442695
    %v360 = vpow.pop %v359
    %v361 = vmul.f32 %v355, 1.442695
    %v362 = vpow.pop %v361
    %v363 = vmul.f32 %v356, 1.442695
    %v364 = vpow.pop %v363
    %v365 = vsel %vm101, %v358, 0.0
    %366 = vadd.xlane.f32.xlu0 %v365
    %v367 = vpop.xlane.xlu0 %366
    %v368 = vsel %vm101, %v360, 0.0
    %369 = vadd.xlane.f32.xlu0 %v368
    %v370 = vpop.xlane.xlu0 %369
    %v371 = vsel %vm101, %v362, 0.0
    %372 = vadd.xlane.f32.xlu0 %v371
    %v373 = vpop.xlane.xlu0 %372
    %v374 = vsel %vm101, %v364, 0.0
    %375 = vadd.xlane.f32.xlu0 %v374
    %v376 = vpop.xlane.xlu0 %375
    %v377 = vrcp.pop %v367
    %v378 = vrcp.pop %v370
    %v379 = vrcp.pop %v373
    %v380 = vrcp.pop %v376
    %v381 = vmul.f32 %v358, %v377
    %v382 = vmul.f32 %v360, %v378
    %v383 = vmul.f32 %v362, %v379
    %v384 = vmul.f32 %v364, %v380
    %386 = vrot.lane.b32.xlu0 %v175, 64
    %v387 = vpop.permute.xlu0 %386
    %v389 = vsel %vm101, %v381, 0
    %v392 = vsel %vm101, %v382, 0
    %v395 = vsel %vm101, %v383, 0
    %v398 = vsel %vm101, %v384, 0
    %v400 = vsel %vm101, %v387, 0
    %402 = vmatprep.subr.mxu0 0.0
    %403 = vmatpush1.xpose.msra.mxu0 %v400
    %404 = vmatprep.subr.mxu0 0.0
    %405 = vmatpush1.xpose.msra.mxu0 0.0
    %406 = vmatprep.subr.mxu0 0.0
    %407 = vmatpush1.xpose.msra.mxu0 0.0
    %408 = vmatprep.subr.mxu0 0.0
    %409 = vmatpush1.xpose.msra.mxu0 0.0
    %410 = vmatprep.subr.mxu0 0.0
    %411 = vmatpush1.xpose.msra.mxu0 0.0
    %412 = vmatprep.subr.mxu0 0.0
    %413 = vmatpush1.xpose.msra.mxu0 0.0
    %414 = vmatprep.subr.mxu0 0.0
    %415 = vmatpush1.xpose.msra.mxu0 0.0
    %416 = vmatprep.subr.mxu0 0.0
    %417 = vmatpush1.xpose.msra.mxu0 0.0
    %418 = vmatprep.subr.mxu0 0.0
    %419 = vmatpush1.xpose.msra.mxu0 0.0
    %420 = vmatprep.subr.mxu0 0.0
    %421 = vmatpush1.xpose.msra.mxu0 0.0
    %422 = vmatprep.subr.mxu0 0.0
    %423 = vmatpush1.xpose.msra.mxu0 0.0
    %424 = vmatprep.subr.mxu0 0.0
    %425 = vmatpush1.xpose.msra.mxu0 0.0
    %426 = vmatprep.subr.mxu0 0.0
    %427 = vmatpush1.xpose.msra.mxu0 0.0
    %428 = vmatprep.subr.mxu0 0.0
    %429 = vmatpush1.xpose.msra.mxu0 0.0
    %430 = vmatprep.subr.mxu0 0.0
    %431 = vmatpush1.xpose.msra.mxu0 0.0
    %432 = vmatprep.subr.mxu0 0.0
    %433 = vmatpush1.xpose.msra.mxu0 0.0
    %434 = vmatprep.subr.mxu0 0.0
    %435 = vmatpush1.xpose.msra.mxu0 0.0
    %436 = vmatprep.subr.mxu0 0.0
    %437 = vmatpush1.xpose.msra.mxu0 0.0
    %438 = vmatprep.subr.mxu0 0.0
    %439 = vmatpush1.xpose.msra.mxu0 0.0
    %440 = vmatprep.subr.mxu0 0.0
    %441 = vmatpush1.xpose.msra.mxu0 0.0
    %442 = vmatprep.subr.mxu0 0.0
    %443 = vmatpush1.xpose.msra.mxu0 0.0
    %444 = vmatprep.subr.mxu0 0.0
    %445 = vmatpush1.xpose.msra.mxu0 0.0
    %446 = vmatprep.subr.mxu0 0.0
    %447 = vmatpush1.xpose.msra.mxu0 0.0
    %448 = vmatprep.subr.mxu0 0.0
    %449 = vmatpush1.xpose.msra.mxu0 0.0
    %450 = vmatprep.subr.mxu0 0.0
    %451 = vmatpush1.xpose.msra.mxu0 0.0
    %452 = vmatprep.subr.mxu0 0.0
    %453 = vmatpush1.xpose.msra.mxu0 0.0
    %454 = vmatprep.subr.mxu0 0.0
    %455 = vmatpush1.xpose.msra.mxu0 0.0
    %456 = vmatprep.subr.mxu0 0.0
    %457 = vmatpush1.xpose.msra.mxu0 0.0
    %458 = vmatprep.subr.mxu0 0.0
    %459 = vmatpush1.xpose.msra.mxu0 0.0
    %460 = vmatprep.subr.mxu0 0.0
    %461 = vmatpush1.xpose.msra.mxu0 0.0
    %462 = vmatprep.subr.mxu0 0.0
    %463 = vmatpush1.xpose.msra.mxu0 0.0
    %464 = vmatprep.subr.mxu0 0.0
    %465 = vmatpush1.xpose.msra.mxu0 0.0
    %466 = vmatprep.mubr.f32.mxu0 0.0
    %467 = vmatmul.mubr.f32.gmra.mrb[0].mxu0 %v389
    %v468 = vpop.f32.mrb[0].mxu0
    %v469 = vadd.f32 0.0, %v468
    %v470 = vpop.f32.mrb[0].mxu0
    %471 = vmatprep.mubr.f32.mxu0 0.0
    %472 = vmatmul.mubr.f32.gmra.mrb[0].mxu0 %v392
    %v473 = vpop.f32.mrb[0].mxu0
    %v474 = vadd.f32 0.0, %v473
    %v475 = vpop.f32.mrb[0].mxu0
    %476 = vmatprep.mubr.f32.mxu0 0.0
    %477 = vmatmul.mubr.f32.gmra.mrb[0].mxu0 %v395
    %v478 = vpop.f32.mrb[0].mxu0
    %v479 = vadd.f32 0.0, %v478
    %v480 = vpop.f32.mrb[0].mxu0
    %481 = vmatprep.mubr.f32.mxu0 0.0
    %482 = vmatmul.mubr.f32.gmra.mrb[0].mxu0 %v398
    %v483 = vpop.f32.mrb[0].mxu0
    %v484 = vadd.f32 0.0, %v483
    %v485 = vpop.f32.mrb[0].mxu0
    %486 = vdwg.mxu0
    %v487 = vld [vmem:[#allocation10] sm:$0xff]
    %v489 = vsel %vm101, %v487, 0
    %491 = vmatprep.subr.mxu0 0.0
    %492 = vmatpush1.msra.mxu0 %v469
    %493 = vmatprep.subr.mxu0 0.0
    %494 = vmatpush1.msra.mxu0 %v474
    %495 = vmatprep.subr.mxu0 0.0
    %496 = vmatpush1.msra.mxu0 %v479
    %497 = vmatprep.subr.mxu0 0.0
    %498 = vmatpush1.msra.mxu0 %v484
    %499 = vmatprep.subr.mxu0 0.0
    %500 = vmatpush1.msra.mxu0 0.0
    %501 = vmatprep.subr.mxu0 0.0
    %502 = vmatpush1.msra.mxu0 0.0
    %503 = vmatprep.subr.mxu0 0.0
    %504 = vmatpush1.msra.mxu0 0.0
    %505 = vmatprep.subr.mxu0 0.0
    %506 = vmatpush1.msra.mxu0 0.0
    %507 = vmatprep.subr.mxu0 0.0
    %508 = vmatpush1.msra.mxu0 0.0
    %509 = vmatprep.subr.mxu0 0.0
    %510 = vmatpush1.msra.mxu0 0.0
    %511 = vmatprep.subr.mxu0 0.0
    %512 = vmatpush1.msra.mxu0 0.0
    %513 = vmatprep.subr.mxu0 0.0
    %514 = vmatpush1.msra.mxu0 0.0
    %515 = vmatprep.subr.mxu0 0.0
    %516 = vmatpush1.msra.mxu0 0.0
    %517 = vmatprep.subr.mxu0 0.0
    %518 = vmatpush1.msra.mxu0 0.0
    %519 = vmatprep.subr.mxu0 0.0
    %520 = vmatpush1.msra.mxu0 0.0
    %521 = vmatprep.subr.mxu0 0.0
    %522 = vmatpush1.msra.mxu0 0.0
    %523 = vmatprep.subr.mxu0 0.0
    %524 = vmatpush1.msra.mxu0 0.0
    %525 = vmatprep.subr.mxu0 0.0
    %526 = vmatpush1.msra.mxu0 0.0
    %527 = vmatprep.subr.mxu0 0.0
    %528 = vmatpush1.msra.mxu0 0.0
    %529 = vmatprep.subr.mxu0 0.0
    %530 = vmatpush1.msra.mxu0 0.0
    %531 = vmatprep.subr.mxu0 0.0
    %532 = vmatpush1.msra.mxu0 0.0
    %533 = vmatprep.subr.mxu0 0.0
    %534 = vmatpush1.msra.mxu0 0.0
    %535 = vmatprep.subr.mxu0 0.0
    %536 = vmatpush1.msra.mxu0 0.0
    %537 = vmatprep.subr.mxu0 0.0
    %538 = vmatpush1.msra.mxu0 0.0
    %539 = vmatprep.subr.mxu0 0.0
    %540 = vmatpush1.msra.mxu0 0.0
    %541 = vmatprep.subr.mxu0 0.0
    %542 = vmatpush1.msra.mxu0 0.0
    %543 = vmatprep.subr.mxu0 0.0
    %544 = vmatpush1.msra.mxu0 0.0
    %545 = vmatprep.subr.mxu0 0.0
    %546 = vmatpush1.msra.mxu0 0.0
    %547 = vmatprep.subr.mxu0 0.0
    %548 = vmatpush1.msra.mxu0 0.0
    %549 = vmatprep.subr.mxu0 0.0
    %550 = vmatpush1.msra.mxu0 0.0
    %551 = vmatprep.subr.mxu0 0.0
    %552 = vmatpush1.msra.mxu0 0.0
    %553 = vmatprep.subr.mxu0 0.0
    %554 = vmatpush1.msra.mxu0 0.0
    %555 = vmatprep.mubr.f32.mxu0 0.0
    %556 = vmatmul.mubr.f32.gmra.mrb[0].mxu0 %v489
    %v557 = vpop.f32.mrb[0].mxu0
    %v558 = vadd.f32 0.0, %v557
    %v559 = vpop.f32.mrb[0].mxu0
    %560 = vdwg.mxu0
    %s561 = scalar_lea.vmem [#allocation10], 8
    %v562 = vld [vmem:[%s561] sm:$0xff]
    %v564 = vsel %vm101, %v562, 0
    %566 = vmatprep.subr.mxu0 0.0
    %567 = vmatpush1.msra.mxu0 %v469
    %568 = vmatprep.subr.mxu0 0.0
    %569 = vmatpush1.msra.mxu0 %v474
    %570 = vmatprep.subr.mxu0 0.0
    %571 = vmatpush1.msra.mxu0 %v479
    %572 = vmatprep.subr.mxu0 0.0
    %573 = vmatpush1.msra.mxu0 %v484
    %574 = vmatprep.subr.mxu0 0.0
    %575 = vmatpush1.msra.mxu0 0.0
    %576 = vmatprep.subr.mxu0 0.0
    %577 = vmatpush1.msra.mxu0 0.0
    %578 = vmatprep.subr.mxu0 0.0
    %579 = vmatpush1.msra.mxu0 0.0
    %580 = vmatprep.subr.mxu0 0.0
    %581 = vmatpush1.msra.mxu0 0.0
    %582 = vmatprep.subr.mxu0 0.0
    %583 = vmatpush1.msra.mxu0 0.0
    %584 = vmatprep.subr.mxu0 0.0
    %585 = vmatpush1.msra.mxu0 0.0
    %586 = vmatprep.subr.mxu0 0.0
    %587 = vmatpush1.msra.mxu0 0.0
    %588 = vmatprep.subr.mxu0 0.0
    %589 = vmatpush1.msra.mxu0 0.0
    %590 = vmatprep.subr.mxu0 0.0
    %591 = vmatpush1.msra.mxu0 0.0
    %592 = vmatprep.subr.mxu0 0.0
    %593 = vmatpush1.msra.mxu0 0.0
    %594 = vmatprep.subr.mxu0 0.0
    %595 = vmatpush1.msra.mxu0 0.0
    %596 = vmatprep.subr.mxu0 0.0
    %597 = vmatpush1.msra.mxu0 0.0
    %598 = vmatprep.subr.mxu0 0.0
    %599 = vmatpush1.msra.mxu0 0.0
    %600 = vmatprep.subr.mxu0 0.0
    %601 = vmatpush1.msra.mxu0 0.0
    %602 = vmatprep.subr.mxu0 0.0
    %603 = vmatpush1.msra.mxu0 0.0
    %604 = vmatprep.subr.mxu0 0.0
    %605 = vmatpush1.msra.mxu0 0.0
    %606 = vmatprep.subr.mxu0 0.0
    %607 = vmatpush1.msra.mxu0 0.0
    %608 = vmatprep.subr.mxu0 0.0
    %609 = vmatpush1.msra.mxu0 0.0
    %610 = vmatprep.subr.mxu0 0.0
    %611 = vmatpush1.msra.mxu0 0.0
    %612 = vmatprep.subr.mxu0 0.0
    %613 = vmatpush1.msra.mxu0 0.0
    %614 = vmatprep.subr.mxu0 0.0
    %615 = vmatpush1.msra.mxu0 0.0
    %616 = vmatprep.subr.mxu0 0.0
    %617 = vmatpush1.msra.mxu0 0.0
    %618 = vmatprep.subr.mxu0 0.0
    %619 = vmatpush1.msra.mxu0 0.0
    %620 = vmatprep.subr.mxu0 0.0
    %621 = vmatpush1.msra.mxu0 0.0
    %622 = vmatprep.subr.mxu0 0.0
    %623 = vmatpush1.msra.mxu0 0.0
    %624 = vmatprep.subr.mxu0 0.0
    %625 = vmatpush1.msra.mxu0 0.0
    %626 = vmatprep.subr.mxu0 0.0
    %627 = vmatpush1.msra.mxu0 0.0
    %628 = vmatprep.subr.mxu0 0.0
    %629 = vmatpush1.msra.mxu0 0.0
    %630 = vmatprep.mubr.f32.mxu0 0.0
    %631 = vmatmul.mubr.f32.gmra.mrb[0].mxu0 %v564
    %v632 = vpop.f32.mrb[0].mxu0
    %v633 = vadd.f32 0.0, %v632
    %v634 = vpop.f32.mrb[0].mxu0
    %635 = vdwg.mxu0
    %s636 = scalar_lea.vmem [#allocation10], 16
    %v637 = vld [vmem:[%s636] sm:$0xff]
    %v639 = vsel %vm101, %v637, 0
    %641 = vmatprep.subr.mxu0 0.0
    %642 = vmatpush1.msra.mxu0 %v469
    %643 = vmatprep.subr.mxu0 0.0
    %644 = vmatpush1.msra.mxu0 %v474
    %645 = vmatprep.subr.mxu0 0.0
    %646 = vmatpush1.msra.mxu0 %v479
    %647 = vmatprep.subr.mxu0 0.0
    %648 = vmatpush1.msra.mxu0 %v484
    %649 = vmatprep.subr.mxu0 0.0
    %650 = vmatpush1.msra.mxu0 0.0
    %651 = vmatprep.subr.mxu0 0.0
    %652 = vmatpush1.msra.mxu0 0.0
    %653 = vmatprep.subr.mxu0 0.0
    %654 = vmatpush1.msra.mxu0 0.0
    %655 = vmatprep.subr.mxu0 0.0
    %656 = vmatpush1.msra.mxu0 0.0
    %657 = vmatprep.subr.mxu0 0.0
    %658 = vmatpush1.msra.mxu0 0.0
    %659 = vmatprep.subr.mxu0 0.0
    %660 = vmatpush1.msra.mxu0 0.0
    %661 = vmatprep.subr.mxu0 0.0
    %662 = vmatpush1.msra.mxu0 0.0
    %663 = vmatprep.subr.mxu0 0.0
    %664 = vmatpush1.msra.mxu0 0.0
    %665 = vmatprep.subr.mxu0 0.0
    %666 = vmatpush1.msra.mxu0 0.0
    %667 = vmatprep.subr.mxu0 0.0
    %668 = vmatpush1.msra.mxu0 0.0
    %669 = vmatprep.subr.mxu0 0.0
    %670 = vmatpush1.msra.mxu0 0.0
    %671 = vmatprep.subr.mxu0 0.0
    %672 = vmatpush1.msra.mxu0 0.0
    %673 = vmatprep.subr.mxu0 0.0
    %674 = vmatpush1.msra.mxu0 0.0
    %675 = vmatprep.subr.mxu0 0.0
    %676 = vmatpush1.msra.mxu0 0.0
    %677 = vmatprep.subr.mxu0 0.0
    %678 = vmatpush1.msra.mxu0 0.0
    %679 = vmatprep.subr.mxu0 0.0
    %680 = vmatpush1.msra.mxu0 0.0
    %681 = vmatprep.subr.mxu0 0.0
    %682 = vmatpush1.msra.mxu0 0.0
    %683 = vmatprep.subr.mxu0 0.0
    %684 = vmatpush1.msra.mxu0 0.0
    %685 = vmatprep.subr.mxu0 0.0
    %686 = vmatpush1.msra.mxu0 0.0
    %687 = vmatprep.subr.mxu0 0.0
    %688 = vmatpush1.msra.mxu0 0.0
    %689 = vmatprep.subr.mxu0 0.0
    %690 = vmatpush1.msra.mxu0 0.0
    %691 = vmatprep.subr.mxu0 0.0
    %692 = vmatpush1.msra.mxu0 0.0
    %693 = vmatprep.subr.mxu0 0.0
    %694 = vmatpush1.msra.mxu0 0.0
    %695 = vmatprep.subr.mxu0 0.0
    %696 = vmatpush1.msra.mxu0 0.0
    %697 = vmatprep.subr.mxu0 0.0
    %698 = vmatpush1.msra.mxu0 0.0
    %699 = vmatprep.subr.mxu0 0.0
    %700 = vmatpush1.msra.mxu0 0.0
    %701 = vmatprep.subr.mxu0 0.0
    %702 = vmatpush1.msra.mxu0 0.0
    %703 = vmatprep.subr.mxu0 0.0
    %704 = vmatpush1.msra.mxu0 0.0
    %705 = vmatprep.mubr.f32.mxu0 0.0
    %706 = vmatmul.mubr.f32.gmra.mrb[0].mxu0 %v639
    %v707 = vpop.f32.mrb[0].mxu0
    %v708 = vadd.f32 0.0, %v707
    %v709 = vpop.f32.mrb[0].mxu0
    %710 = vdwg.mxu0
    %s711 = scalar_lea.vmem [#allocation10], 24
    %v712 = vld [vmem:[%s711] sm:$0xff]
    %v714 = vsel %vm101, %v712, 0
    %716 = vmatprep.subr.mxu0 0.0
    %717 = vmatpush1.msra.mxu0 %v469
    %718 = vmatprep.subr.mxu0 0.0
    %719 = vmatpush1.msra.mxu0 %v474
    %720 = vmatprep.subr.mxu0 0.0
    %721 = vmatpush1.msra.mxu0 %v479
    %722 = vmatprep.subr.mxu0 0.0
    %723 = vmatpush1.msra.mxu0 %v484
    %724 = vmatprep.subr.mxu0 0.0
    %725 = vmatpush1.msra.mxu0 0.0
    %726 = vmatprep.subr.mxu0 0.0
    %727 = vmatpush1.msra.mxu0 0.0
    %728 = vmatprep.subr.mxu0 0.0
    %729 = vmatpush1.msra.mxu0 0.0
    %730 = vmatprep.subr.mxu0 0.0
    %731 = vmatpush1.msra.mxu0 0.0
    %732 = vmatprep.subr.mxu0 0.0
    %733 = vmatpush1.msra.mxu0 0.0
    %734 = vmatprep.subr.mxu0 0.0
    %735 = vmatpush1.msra.mxu0 0.0
    %736 = vmatprep.subr.mxu0 0.0
    %737 = vmatpush1.msra.mxu0 0.0
    %738 = vmatprep.subr.mxu0 0.0
    %739 = vmatpush1.msra.mxu0 0.0
    %740 = vmatprep.subr.mxu0 0.0
    %741 = vmatpush1.msra.mxu0 0.0
    %742 = vmatprep.subr.mxu0 0.0
    %743 = vmatpush1.msra.mxu0 0.0
    %744 = vmatprep.subr.mxu0 0.0
    %745 = vmatpush1.msra.mxu0 0.0
    %746 = vmatprep.subr.mxu0 0.0
    %747 = vmatpush1.msra.mxu0 0.0
    %748 = vmatprep.subr.mxu0 0.0
    %749 = vmatpush1.msra.mxu0 0.0
    %750 = vmatprep.subr.mxu0 0.0
    %751 = vmatpush1.msra.mxu0 0.0
    %752 = vmatprep.subr.mxu0 0.0
    %753 = vmatpush1.msra.mxu0 0.0
    %754 = vmatprep.subr.mxu0 0.0
    %755 = vmatpush1.msra.mxu0 0.0
    %756 = vmatprep.subr.mxu0 0.0
    %757 = vmatpush1.msra.mxu0 0.0
    %758 = vmatprep.subr.mxu0 0.0
    %759 = vmatpush1.msra.mxu0 0.0
    %760 = vmatprep.subr.mxu0 0.0
    %761 = vmatpush1.msra.mxu0 0.0
    %762 = vmatprep.subr.mxu0 0.0
    %763 = vmatpush1.msra.mxu0 0.0
    %764 = vmatprep.subr.mxu0 0.0
    %765 = vmatpush1.msra.mxu0 0.0
    %766 = vmatprep.subr.mxu0 0.0
    %767 = vmatpush1.msra.mxu0 0.0
    %768 = vmatprep.subr.mxu0 0.0
    %769 = vmatpush1.msra.mxu0 0.0
    %770 = vmatprep.subr.mxu0 0.0
    %771 = vmatpush1.msra.mxu0 0.0
    %772 = vmatprep.subr.mxu0 0.0
    %773 = vmatpush1.msra.mxu0 0.0
    %774 = vmatprep.subr.mxu0 0.0
    %775 = vmatpush1.msra.mxu0 0.0
    %776 = vmatprep.subr.mxu0 0.0
    %777 = vmatpush1.msra.mxu0 0.0
    %778 = vmatprep.subr.mxu0 0.0
    %779 = vmatpush1.msra.mxu0 0.0
    %780 = vmatprep.mubr.f32.mxu0 0.0
    %781 = vmatmul.mubr.f32.gmra.mrb[0].mxu0 %v714
    %v782 = vpop.f32.mrb[0].mxu0
    %v783 = vadd.f32 0.0, %v782
    %v784 = vpop.f32.mrb[0].mxu0
    %785 = vdwg.mxu0
    %787 = vrot.lane.b32.xlu0 %v633, 8
    %v788 = vpop.permute.xlu0 %787
    %791 = vrot.lane.b32.xlu0 %v708, 16
    %v792 = vpop.permute.xlu0 %791
    %795 = vrot.lane.b32.xlu0 %v783, 24
    %v796 = vpop.permute.xlu0 %795
    %v798 = vsel %vm243, %v558, %v788
    %vm799 = vcmask 130048
    %v800 = vsel %vm799, %v798, %v792
    %vm801 = vcmask 195584
    %v802 = vsel %vm801, %v800, %v796
    %v803 = vmul.f32 %v180, %v180
    %v804 = vsel %vm189, %v803, 0.0
    %v805 = vrot.slane %v804, 4
    %v806 = vadd.f32 %v804, %v805
    %v807 = vrot.slane %v806, 2
    %v808 = vadd.f32 %v806, %v807
    %v809 = vrot.slane %v808, 1
    %v810 = vadd.f32 %v808, %v809
    %v811 = vmax.f32 %v810, 1e-24
    %v812 = vrsqrt.pop %v811
    %v813 = vmul.f32 %v180, %v812
    %v814 = vmul.f32 %v813, %v204
    %816 = vrot.lane.b32.xlu0 %v813, 96
    %v817 = vpop.permute.xlu0 %816
    %819 = vxpose.xlu0.b32.start [1/16] %v817, 128
    %820 = vxpose.xlu0.b32.cont [2/16] 0.0, 128
    %821 = vxpose.xlu0.b32.cont [3/16] 0.0, 128
    %822 = vxpose.xlu0.b32.cont [4/16] 0.0, 128
    %823 = vxpose.xlu0.b32.cont [5/16] 0.0, 128
    %824 = vxpose.xlu0.b32.cont [6/16] 0.0, 128
    %825 = vxpose.xlu0.b32.cont [7/16] 0.0, 128
    %826 = vxpose.xlu0.b32.cont [8/16] 0.0, 128
    %827 = vxpose.xlu0.b32.cont [9/16] 0.0, 128
    %828 = vxpose.xlu0.b32.cont [10/16] 0.0, 128
    %829 = vxpose.xlu0.b32.cont [11/16] 0.0, 128
    %830 = vxpose.xlu0.b32.cont [12/16] 0.0, 128
    %831 = vxpose.xlu0.b32.cont [13/16] 0.0, 128
    %832 = vxpose.xlu0.b32.cont [14/16] 0.0, 128
    %833 = vxpose.xlu0.b32.cont [15/16] 0.0, 128
    %834 = vxpose.xlu0.b32.end [16/16] 0.0, 128
    %v835 = vpop.trf.xlu0
    %v836 = vpop.trf.xlu0
    %v837 = vpop.trf.xlu0
    %v838 = vpop.trf.xlu0
    %v839 = vpop.trf.xlu0
    %v840 = vpop.trf.xlu0
    %v841 = vpop.trf.xlu0
    %v842 = vpop.trf.xlu0
    %v843 = vpop.trf.xlu0
    %v844 = vpop.trf.xlu0
    %v845 = vpop.trf.xlu0
    %v846 = vpop.trf.xlu0
    %v847 = vpop.trf.xlu0
    %v848 = vpop.trf.xlu0
    %v849 = vpop.trf.xlu0
    %v850 = vpop.trf.xlu0
    %v852 = vsel %vm243, %v835, 0
    %v855 = vsel %vm243, %v836, 0
    %v858 = vsel %vm243, %v837, 0
    %v861 = vsel %vm243, %v838, 0
    %863 = vmatprep.subr.mxu0 0.0
    %864 = vmatpush1.msra.mxu0 %v814
    %865 = vmatprep.subr.mxu0 0.0
    %866 = vmatpush1.msra.mxu0 0.0
    %867 = vmatprep.subr.mxu0 0.0
    %868 = vmatpush1.msra.mxu0 0.0
    %869 = vmatprep.subr.mxu0 0.0
    %870 = vmatpush1.msra.mxu0 0.0
    %871 = vmatprep.subr.mxu0 0.0
    %872 = vmatpush1.msra.mxu0 0.0
    %873 = vmatprep.subr.mxu0 0.0
    %874 = vmatpush1.msra.mxu0 0.0
    %875 = vmatprep.subr.mxu0 0.0
    %876 = vmatpush1.msra.mxu0 0.0
    %877 = vmatprep.subr.mxu0 0.0
    %878 = vmatpush1.msra.mxu0 0.0
    %879 = vmatprep.subr.mxu0 0.0
    %880 = vmatpush1.msra.mxu0 0.0
    %881 = vmatprep.subr.mxu0 0.0
    %882 = vmatpush1.msra.mxu0 0.0
    %883 = vmatprep.subr.mxu0 0.0
    %884 = vmatpush1.msra.mxu0 0.0
    %885 = vmatprep.subr.mxu0 0.0
    %886 = vmatpush1.msra.mxu0 0.0
    %887 = vmatprep.subr.mxu0 0.0
    %888 = vmatpush1.msra.mxu0 0.0
    %889 = vmatprep.subr.mxu0 0.0
    %890 = vmatpush1.msra.mxu0 0.0
    %891 = vmatprep.subr.mxu0 0.0
    %892 = vmatpush1.msra.mxu0 0.0
    %893 = vmatprep.subr.mxu0 0.0
    %894 = vmatpush1.msra.mxu0 0.0
    %895 = vmatprep.subr.mxu0 0.0
    %896 = vmatpush1.msra.mxu0 0.0
    %897 = vmatprep.subr.mxu0 0.0
    %898 = vmatpush1.msra.mxu0 0.0
    %899 = vmatprep.subr.mxu0 0.0
    %900 = vmatpush1.msra.mxu0 0.0
    %901 = vmatprep.subr.mxu0 0.0
    %902 = vmatpush1.msra.mxu0 0.0
    %903 = vmatprep.subr.mxu0 0.0
    %904 = vmatpush1.msra.mxu0 0.0
    %905 = vmatprep.subr.mxu0 0.0
    %906 = vmatpush1.msra.mxu0 0.0
    %907 = vmatprep.subr.mxu0 0.0
    %908 = vmatpush1.msra.mxu0 0.0
    %909 = vmatprep.subr.mxu0 0.0
    %910 = vmatpush1.msra.mxu0 0.0
    %911 = vmatprep.subr.mxu0 0.0
    %912 = vmatpush1.msra.mxu0 0.0
    %913 = vmatprep.subr.mxu0 0.0
    %914 = vmatpush1.msra.mxu0 0.0
    %915 = vmatprep.subr.mxu0 0.0
    %916 = vmatpush1.msra.mxu0 0.0
    %917 = vmatprep.subr.mxu0 0.0
    %918 = vmatpush1.msra.mxu0 0.0
    %919 = vmatprep.subr.mxu0 0.0
    %920 = vmatpush1.msra.mxu0 0.0
    %921 = vmatprep.subr.mxu0 0.0
    %922 = vmatpush1.msra.mxu0 0.0
    %923 = vmatprep.subr.mxu0 0.0
    %924 = vmatpush1.msra.mxu0 0.0
    %925 = vmatprep.subr.mxu0 0.0
    %926 = vmatpush1.msra.mxu0 0.0
    %927 = vmatprep.mubr.f32.mxu0 0.0
    %928 = vmatmul.mubr.f32.gmra.mrb[0].mxu0 %v852
    %v929 = vpop.f32.mrb[0].mxu0
    %v930 = vadd.f32 %v184, %v929
    %v931 = vpop.f32.mrb[0].mxu0
    %932 = vmatprep.mubr.f32.mxu0 0.0
    %933 = vmatmul.mubr.f32.gmra.mrb[0].mxu0 %v855
    %v934 = vpop.f32.mrb[0].mxu0
    %v935 = vadd.f32 %v185, %v934
    %v936 = vpop.f32.mrb[0].mxu0
    %937 = vmatprep.mubr.f32.mxu0 0.0
    %938 = vmatmul.mubr.f32.gmra.mrb[0].mxu0 %v858
    %v939 = vpop.f32.mrb[0].mxu0
    %v940 = vadd.f32 %v186, %v939
    %v941 = vpop.f32.mrb[0].mxu0
    %942 = vmatprep.mubr.f32.mxu0 0.0
    %943 = vmatmul.mubr.f32.gmra.mrb[0].mxu0 %v861
    %v944 = vpop.f32.mrb[0].mxu0
    %v945 = vadd.f32 %v187, %v944
    %v946 = vpop.f32.mrb[0].mxu0
    %947 = vdwg.mxu0
    %v948 = vsel %vm101, %v930, -inf
    %949 = vmax.xlane.f32.xlu0 %v948
    %v950 = vpop.xlane.xlu0 %949
    %v951 = vsel %vm101, %v935, -inf
    %952 = vmax.xlane.f32.xlu0 %v951
    %v953 = vpop.xlane.xlu0 %952
    %v954 = vsel %vm101, %v940, -inf
    %955 = vmax.xlane.f32.xlu0 %v954
    %v956 = vpop.xlane.xlu0 %955
    %v957 = vsel %vm101, %v945, -inf
    %958 = vmax.xlane.f32.xlu0 %v957
    %v959 = vpop.xlane.xlu0 %958
    %v960 = vsub.f32 %v930, %v950
    %v961 = vsub.f32 %v935, %v953
    %v962 = vsub.f32 %v940, %v956
    %v963 = vsub.f32 %v945, %v959
    %v964 = vmul.f32 %v960, 1.442695
    %v965 = vpow.pop %v964
    %v966 = vmul.f32 %v961, 1.442695
    %v967 = vpow.pop %v966
    %v968 = vmul.f32 %v962, 1.442695
    %v969 = vpow.pop %v968
    %v970 = vmul.f32 %v963, 1.442695
    %v971 = vpow.pop %v970
    %v972 = vsel %vm101, %v965, 0.0
    %973 = vadd.xlane.f32.xlu0 %v972
    %v974 = vpop.xlane.xlu0 %973
    %v975 = vsel %vm101, %v967, 0.0
    %976 = vadd.xlane.f32.xlu0 %v975
    %v977 = vpop.xlane.xlu0 %976
    %v978 = vsel %vm101, %v969, 0.0
    %979 = vadd.xlane.f32.xlu0 %v978
    %v980 = vpop.xlane.xlu0 %979
    %v981 = vsel %vm101, %v971, 0.0
    %982 = vadd.xlane.f32.xlu0 %v981
    %v983 = vpop.xlane.xlu0 %982
    %v984 = vrcp.pop %v974
    %v985 = vrcp.pop %v977
    %v986 = vrcp.pop %v980
    %v987 = vrcp.pop %v983
    %v988 = vmul.f32 %v965, %v984
    %v989 = vmul.f32 %v967, %v985
    %v990 = vmul.f32 %v969, %v986
    %v991 = vmul.f32 %v971, %v987
    %993 = vrot.lane.b32.xlu0 %v180, 64
    %v994 = vpop.permute.xlu0 %993
    %v996 = vsel %vm101, %v988, 0
    %v999 = vsel %vm101, %v989, 0
    %v1002 = vsel %vm101, %v990, 0
    %v1005 = vsel %vm101, %v991, 0
    %v1007 = vsel %vm101, %v994, 0
    %1009 = vmatprep.subr.mxu0 0.0
    %1010 = vmatpush1.xpose.msra.mxu0 %v1007
    %1011 = vmatprep.subr.mxu0 0.0
    %1012 = vmatpush1.xpose.msra.mxu0 0.0
    %1013 = vmatprep.subr.mxu0 0.0
    %1014 = vmatpush1.xpose.msra.mxu0 0.0
    %1015 = vmatprep.subr.mxu0 0.0
    %1016 = vmatpush1.xpose.msra.mxu0 0.0
    %1017 = vmatprep.subr.mxu0 0.0
    %1018 = vmatpush1.xpose.msra.mxu0 0.0
    %1019 = vmatprep.subr.mxu0 0.0
    %1020 = vmatpush1.xpose.msra.mxu0 0.0
    %1021 = vmatprep.subr.mxu0 0.0
    %1022 = vmatpush1.xpose.msra.mxu0 0.0
    %1023 = vmatprep.subr.mxu0 0.0
    %1024 = vmatpush1.xpose.msra.mxu0 0.0
    %1025 = vmatprep.subr.mxu0 0.0
    %1026 = vmatpush1.xpose.msra.mxu0 0.0
    %1027 = vmatprep.subr.mxu0 0.0
    %1028 = vmatpush1.xpose.msra.mxu0 0.0
    %1029 = vmatprep.subr.mxu0 0.0
    %1030 = vmatpush1.xpose.msra.mxu0 0.0
    %1031 = vmatprep.subr.mxu0 0.0
    %1032 = vmatpush1.xpose.msra.mxu0 0.0
    %1033 = vmatprep.subr.mxu0 0.0
    %1034 = vmatpush1.xpose.msra.mxu0 0.0
    %1035 = vmatprep.subr.mxu0 0.0
    %1036 = vmatpush1.xpose.msra.mxu0 0.0
    %1037 = vmatprep.subr.mxu0 0.0
    %1038 = vmatpush1.xpose.msra.mxu0 0.0
    %1039 = vmatprep.subr.mxu0 0.0
    %1040 = vmatpush1.xpose.msra.mxu0 0.0
    %1041 = vmatprep.subr.mxu0 0.0
    %1042 = vmatpush1.xpose.msra.mxu0 0.0
    %1043 = vmatprep.subr.mxu0 0.0
    %1044 = vmatpush1.xpose.msra.mxu0 0.0
    %1045 = vmatprep.subr.mxu0 0.0
    %1046 = vmatpush1.xpose.msra.mxu0 0.0
    %1047 = vmatprep.subr.mxu0 0.0
    %1048 = vmatpush1.xpose.msra.mxu0 0.0
    %1049 = vmatprep.subr.mxu0 0.0
    %1050 = vmatpush1.xpose.msra.mxu0 0.0
    %1051 = vmatprep.subr.mxu0 0.0
    %1052 = vmatpush1.xpose.msra.mxu0 0.0
    %1053 = vmatprep.subr.mxu0 0.0
    %1054 = vmatpush1.xpose.msra.mxu0 0.0
    %1055 = vmatprep.subr.mxu0 0.0
    %1056 = vmatpush1.xpose.msra.mxu0 0.0
    %1057 = vmatprep.subr.mxu0 0.0
    %1058 = vmatpush1.xpose.msra.mxu0 0.0
    %1059 = vmatprep.subr.mxu0 0.0
    %1060 = vmatpush1.xpose.msra.mxu0 0.0
    %1061 = vmatprep.subr.mxu0 0.0
    %1062 = vmatpush1.xpose.msra.mxu0 0.0
    %1063 = vmatprep.subr.mxu0 0.0
    %1064 = vmatpush1.xpose.msra.mxu0 0.0
    %1065 = vmatprep.subr.mxu0 0.0
    %1066 = vmatpush1.xpose.msra.mxu0 0.0
    %1067 = vmatprep.subr.mxu0 0.0
    %1068 = vmatpush1.xpose.msra.mxu0 0.0
    %1069 = vmatprep.subr.mxu0 0.0
    %1070 = vmatpush1.xpose.msra.mxu0 0.0
    %1071 = vmatprep.subr.mxu0 0.0
    %1072 = vmatpush1.xpose.msra.mxu0 0.0
    %1073 = vmatprep.mubr.f32.mxu0 0.0
    %1074 = vmatmul.mubr.f32.gmra.mrb[0].mxu0 %v996
    %v1075 = vpop.f32.mrb[0].mxu0
    %v1076 = vadd.f32 0.0, %v1075
    %v1077 = vpop.f32.mrb[0].mxu0
    %1078 = vmatprep.mubr.f32.mxu0 0.0
    %1079 = vmatmul.mubr.f32.gmra.mrb[0].mxu0 %v999
    %v1080 = vpop.f32.mrb[0].mxu0
    %v1081 = vadd.f32 0.0, %v1080
    %v1082 = vpop.f32.mrb[0].mxu0
    %1083 = vmatprep.mubr.f32.mxu0 0.0
    %1084 = vmatmul.mubr.f32.gmra.mrb[0].mxu0 %v1002
    %v1085 = vpop.f32.mrb[0].mxu0
    %v1086 = vadd.f32 0.0, %v1085
    %v1087 = vpop.f32.mrb[0].mxu0
    %1088 = vmatprep.mubr.f32.mxu0 0.0
    %1089 = vmatmul.mubr.f32.gmra.mrb[0].mxu0 %v1005
    %v1090 = vpop.f32.mrb[0].mxu0
    %v1091 = vadd.f32 0.0, %v1090
    %v1092 = vpop.f32.mrb[0].mxu0
    %1093 = vdwg.mxu0
    %1094 = vmatprep.subr.mxu0 0.0
    %1095 = vmatpush1.msra.mxu0 %v1076
    %1096 = vmatprep.subr.mxu0 0.0
    %1097 = vmatpush1.msra.mxu0 %v1081
    %1098 = vmatprep.subr.mxu0 0.0
    %1099 = vmatpush1.msra.mxu0 %v1086
    %1100 = vmatprep.subr.mxu0 0.0
    %1101 = vmatpush1.msra.mxu0 %v1091
    %1102 = vmatprep.subr.mxu0 0.0
    %1103 = vmatpush1.msra.mxu0 0.0
    %1104 = vmatprep.subr.mxu0 0.0
    %1105 = vmatpush1.msra.mxu0 0.0
    %1106 = vmatprep.subr.mxu0 0.0
    %1107 = vmatpush1.msra.mxu0 0.0
    %1108 = vmatprep.subr.mxu0 0.0
    %1109 = vmatpush1.msra.mxu0 0.0
    %1110 = vmatprep.subr.mxu0 0.0
    %1111 = vmatpush1.msra.mxu0 0.0
    %1112 = vmatprep.subr.mxu0 0.0
    %1113 = vmatpush1.msra.mxu0 0.0
    %1114 = vmatprep.subr.mxu0 0.0
    %1115 = vmatpush1.msra.mxu0 0.0
    %1116 = vmatprep.subr.mxu0 0.0
    %1117 = vmatpush1.msra.mxu0 0.0
    %1118 = vmatprep.subr.mxu0 0.0
    %1119 = vmatpush1.msra.mxu0 0.0
    %1120 = vmatprep.subr.mxu0 0.0
    %1121 = vmatpush1.msra.mxu0 0.0
    %1122 = vmatprep.subr.mxu0 0.0
    %1123 = vmatpush1.msra.mxu0 0.0
    %1124 = vmatprep.subr.mxu0 0.0
    %1125 = vmatpush1.msra.mxu0 0.0
    %1126 = vmatprep.subr.mxu0 0.0
    %1127 = vmatpush1.msra.mxu0 0.0
    %1128 = vmatprep.subr.mxu0 0.0
    %1129 = vmatpush1.msra.mxu0 0.0
    %1130 = vmatprep.subr.mxu0 0.0
    %1131 = vmatpush1.msra.mxu0 0.0
    %1132 = vmatprep.subr.mxu0 0.0
    %1133 = vmatpush1.msra.mxu0 0.0
    %1134 = vmatprep.subr.mxu0 0.0
    %1135 = vmatpush1.msra.mxu0 0.0
    %1136 = vmatprep.subr.mxu0 0.0
    %1137 = vmatpush1.msra.mxu0 0.0
    %1138 = vmatprep.subr.mxu0 0.0
    %1139 = vmatpush1.msra.mxu0 0.0
    %1140 = vmatprep.subr.mxu0 0.0
    %1141 = vmatpush1.msra.mxu0 0.0
    %1142 = vmatprep.subr.mxu0 0.0
    %1143 = vmatpush1.msra.mxu0 0.0
    %1144 = vmatprep.subr.mxu0 0.0
    %1145 = vmatpush1.msra.mxu0 0.0
    %1146 = vmatprep.subr.mxu0 0.0
    %1147 = vmatpush1.msra.mxu0 0.0
    %1148 = vmatprep.subr.mxu0 0.0
    %1149 = vmatpush1.msra.mxu0 0.0
    %1150 = vmatprep.subr.mxu0 0.0
    %1151 = vmatpush1.msra.mxu0 0.0
    %1152 = vmatprep.subr.mxu0 0.0
    %1153 = vmatpush1.msra.mxu0 0.0
    %1154 = vmatprep.subr.mxu0 0.0
    %1155 = vmatpush1.msra.mxu0 0.0
    %1156 = vmatprep.subr.mxu0 0.0
    %1157 = vmatpush1.msra.mxu0 0.0
    %1158 = vmatprep.mubr.f32.mxu0 0.0
    %1159 = vmatmul.mubr.f32.gmra.mrb[0].mxu0 %v489
    %v1160 = vpop.f32.mrb[0].mxu0
    %v1161 = vadd.f32 0.0, %v1160
    %v1162 = vpop.f32.mrb[0].mxu0
    %1163 = vdwg.mxu0
    %1164 = vmatprep.subr.mxu0 0.0
    %1165 = vmatpush1.msra.mxu0 %v1076
    %1166 = vmatprep.subr.mxu0 0.0
    %1167 = vmatpush1.msra.mxu0 %v1081
    %1168 = vmatprep.subr.mxu0 0.0
    %1169 = vmatpush1.msra.mxu0 %v1086
    %1170 = vmatprep.subr.mxu0 0.0
    %1171 = vmatpush1.msra.mxu0 %v1091
    %1172 = vmatprep.subr.mxu0 0.0
    %1173 = vmatpush1.msra.mxu0 0.0
    %1174 = vmatprep.subr.mxu0 0.0
    %1175 = vmatpush1.msra.mxu0 0.0
    %1176 = vmatprep.subr.mxu0 0.0
    %1177 = vmatpush1.msra.mxu0 0.0
    %1178 = vmatprep.subr.mxu0 0.0
    %1179 = vmatpush1.msra.mxu0 0.0
    %1180 = vmatprep.subr.mxu0 0.0
    %1181 = vmatpush1.msra.mxu0 0.0
    %1182 = vmatprep.subr.mxu0 0.0
    %1183 = vmatpush1.msra.mxu0 0.0
    %1184 = vmatprep.subr.mxu0 0.0
    %1185 = vmatpush1.msra.mxu0 0.0
    %1186 = vmatprep.subr.mxu0 0.0
    %1187 = vmatpush1.msra.mxu0 0.0
    %1188 = vmatprep.subr.mxu0 0.0
    %1189 = vmatpush1.msra.mxu0 0.0
    %1190 = vmatprep.subr.mxu0 0.0
    %1191 = vmatpush1.msra.mxu0 0.0
    %1192 = vmatprep.subr.mxu0 0.0
    %1193 = vmatpush1.msra.mxu0 0.0
    %1194 = vmatprep.subr.mxu0 0.0
    %1195 = vmatpush1.msra.mxu0 0.0
    %1196 = vmatprep.subr.mxu0 0.0
    %1197 = vmatpush1.msra.mxu0 0.0
    %1198 = vmatprep.subr.mxu0 0.0
    %1199 = vmatpush1.msra.mxu0 0.0
    %1200 = vmatprep.subr.mxu0 0.0
    %1201 = vmatpush1.msra.mxu0 0.0
    %1202 = vmatprep.subr.mxu0 0.0
    %1203 = vmatpush1.msra.mxu0 0.0
    %1204 = vmatprep.subr.mxu0 0.0
    %1205 = vmatpush1.msra.mxu0 0.0
    %1206 = vmatprep.subr.mxu0 0.0
    %1207 = vmatpush1.msra.mxu0 0.0
    %1208 = vmatprep.subr.mxu0 0.0
    %1209 = vmatpush1.msra.mxu0 0.0
    %1210 = vmatprep.subr.mxu0 0.0
    %1211 = vmatpush1.msra.mxu0 0.0
    %1212 = vmatprep.subr.mxu0 0.0
    %1213 = vmatpush1.msra.mxu0 0.0
    %1214 = vmatprep.subr.mxu0 0.0
    %1215 = vmatpush1.msra.mxu0 0.0
    %1216 = vmatprep.subr.mxu0 0.0
    %1217 = vmatpush1.msra.mxu0 0.0
    %1218 = vmatprep.subr.mxu0 0.0
    %1219 = vmatpush1.msra.mxu0 0.0
    %1220 = vmatprep.subr.mxu0 0.0
    %1221 = vmatpush1.msra.mxu0 0.0
    %1222 = vmatprep.subr.mxu0 0.0
    %1223 = vmatpush1.msra.mxu0 0.0
    %1224 = vmatprep.subr.mxu0 0.0
    %1225 = vmatpush1.msra.mxu0 0.0
    %1226 = vmatprep.subr.mxu0 0.0
    %1227 = vmatpush1.msra.mxu0 0.0
    %1228 = vmatprep.mubr.f32.mxu0 0.0
    %1229 = vmatmul.mubr.f32.gmra.mrb[0].mxu0 %v564
    %v1230 = vpop.f32.mrb[0].mxu0
    %v1231 = vadd.f32 0.0, %v1230
    %v1232 = vpop.f32.mrb[0].mxu0
    %1233 = vdwg.mxu0
    %1234 = vmatprep.subr.mxu0 0.0
    %1235 = vmatpush1.msra.mxu0 %v1076
    %1236 = vmatprep.subr.mxu0 0.0
    %1237 = vmatpush1.msra.mxu0 %v1081
    %1238 = vmatprep.subr.mxu0 0.0
    %1239 = vmatpush1.msra.mxu0 %v1086
    %1240 = vmatprep.subr.mxu0 0.0
    %1241 = vmatpush1.msra.mxu0 %v1091
    %1242 = vmatprep.subr.mxu0 0.0
    %1243 = vmatpush1.msra.mxu0 0.0
    %1244 = vmatprep.subr.mxu0 0.0
    %1245 = vmatpush1.msra.mxu0 0.0
    %1246 = vmatprep.subr.mxu0 0.0
    %1247 = vmatpush1.msra.mxu0 0.0
    %1248 = vmatprep.subr.mxu0 0.0
    %1249 = vmatpush1.msra.mxu0 0.0
    %1250 = vmatprep.subr.mxu0 0.0
    %1251 = vmatpush1.msra.mxu0 0.0
    %1252 = vmatprep.subr.mxu0 0.0
    %1253 = vmatpush1.msra.mxu0 0.0
    %1254 = vmatprep.subr.mxu0 0.0
    %1255 = vmatpush1.msra.mxu0 0.0
    %1256 = vmatprep.subr.mxu0 0.0
    %1257 = vmatpush1.msra.mxu0 0.0
    %1258 = vmatprep.subr.mxu0 0.0
    %1259 = vmatpush1.msra.mxu0 0.0
    %1260 = vmatprep.subr.mxu0 0.0
    %1261 = vmatpush1.msra.mxu0 0.0
    %1262 = vmatprep.subr.mxu0 0.0
    %1263 = vmatpush1.msra.mxu0 0.0
    %1264 = vmatprep.subr.mxu0 0.0
    %1265 = vmatpush1.msra.mxu0 0.0
    %1266 = vmatprep.subr.mxu0 0.0
    %1267 = vmatpush1.msra.mxu0 0.0
    %1268 = vmatprep.subr.mxu0 0.0
    %1269 = vmatpush1.msra.mxu0 0.0
    %1270 = vmatprep.subr.mxu0 0.0
    %1271 = vmatpush1.msra.mxu0 0.0
    %1272 = vmatprep.subr.mxu0 0.0
    %1273 = vmatpush1.msra.mxu0 0.0
    %1274 = vmatprep.subr.mxu0 0.0
    %1275 = vmatpush1.msra.mxu0 0.0
    %1276 = vmatprep.subr.mxu0 0.0
    %1277 = vmatpush1.msra.mxu0 0.0
    %1278 = vmatprep.subr.mxu0 0.0
    %1279 = vmatpush1.msra.mxu0 0.0
    %1280 = vmatprep.subr.mxu0 0.0
    %1281 = vmatpush1.msra.mxu0 0.0
    %1282 = vmatprep.subr.mxu0 0.0
    %1283 = vmatpush1.msra.mxu0 0.0
    %1284 = vmatprep.subr.mxu0 0.0
    %1285 = vmatpush1.msra.mxu0 0.0
    %1286 = vmatprep.subr.mxu0 0.0
    %1287 = vmatpush1.msra.mxu0 0.0
    %1288 = vmatprep.subr.mxu0 0.0
    %1289 = vmatpush1.msra.mxu0 0.0
    %1290 = vmatprep.subr.mxu0 0.0
    %1291 = vmatpush1.msra.mxu0 0.0
    %1292 = vmatprep.subr.mxu0 0.0
    %1293 = vmatpush1.msra.mxu0 0.0
    %1294 = vmatprep.subr.mxu0 0.0
    %1295 = vmatpush1.msra.mxu0 0.0
    %1296 = vmatprep.subr.mxu0 0.0
    %1297 = vmatpush1.msra.mxu0 0.0
    %1298 = vmatprep.mubr.f32.mxu0 0.0
    %1299 = vmatmul.mubr.f32.gmra.mrb[0].mxu0 %v639
    %v1300 = vpop.f32.mrb[0].mxu0
    %v1301 = vadd.f32 0.0, %v1300
    %v1302 = vpop.f32.mrb[0].mxu0
    %1303 = vdwg.mxu0
    %1304 = vmatprep.subr.mxu0 0.0
    %1305 = vmatpush1.msra.mxu0 %v1076
    %1306 = vmatprep.subr.mxu0 0.0
    %1307 = vmatpush1.msra.mxu0 %v1081
    %1308 = vmatprep.subr.mxu0 0.0
    %1309 = vmatpush1.msra.mxu0 %v1086
    %1310 = vmatprep.subr.mxu0 0.0
    %1311 = vmatpush1.msra.mxu0 %v1091
    %1312 = vmatprep.subr.mxu0 0.0
    %1313 = vmatpush1.msra.mxu0 0.0
    %1314 = vmatprep.subr.mxu0 0.0
    %1315 = vmatpush1.msra.mxu0 0.0
    %1316 = vmatprep.subr.mxu0 0.0
    %1317 = vmatpush1.msra.mxu0 0.0
    %1318 = vmatprep.subr.mxu0 0.0
    %1319 = vmatpush1.msra.mxu0 0.0
    %1320 = vmatprep.subr.mxu0 0.0
    %1321 = vmatpush1.msra.mxu0 0.0
    %1322 = vmatprep.subr.mxu0 0.0
    %1323 = vmatpush1.msra.mxu0 0.0
    %1324 = vmatprep.subr.mxu0 0.0
    %1325 = vmatpush1.msra.mxu0 0.0
    %1326 = vmatprep.subr.mxu0 0.0
    %1327 = vmatpush1.msra.mxu0 0.0
    %1328 = vmatprep.subr.mxu0 0.0
    %1329 = vmatpush1.msra.mxu0 0.0
    %1330 = vmatprep.subr.mxu0 0.0
    %1331 = vmatpush1.msra.mxu0 0.0
    %1332 = vmatprep.subr.mxu0 0.0
    %1333 = vmatpush1.msra.mxu0 0.0
    %1334 = vmatprep.subr.mxu0 0.0
    %1335 = vmatpush1.msra.mxu0 0.0
    %1336 = vmatprep.subr.mxu0 0.0
    %1337 = vmatpush1.msra.mxu0 0.0
    %1338 = vmatprep.subr.mxu0 0.0
    %1339 = vmatpush1.msra.mxu0 0.0
    %1340 = vmatprep.subr.mxu0 0.0
    %1341 = vmatpush1.msra.mxu0 0.0
    %1342 = vmatprep.subr.mxu0 0.0
    %1343 = vmatpush1.msra.mxu0 0.0
    %1344 = vmatprep.subr.mxu0 0.0
    %1345 = vmatpush1.msra.mxu0 0.0
    %1346 = vmatprep.subr.mxu0 0.0
    %1347 = vmatpush1.msra.mxu0 0.0
    %1348 = vmatprep.subr.mxu0 0.0
    %1349 = vmatpush1.msra.mxu0 0.0
    %1350 = vmatprep.subr.mxu0 0.0
    %1351 = vmatpush1.msra.mxu0 0.0
    %1352 = vmatprep.subr.mxu0 0.0
    %1353 = vmatpush1.msra.mxu0 0.0
    %1354 = vmatprep.subr.mxu0 0.0
    %1355 = vmatpush1.msra.mxu0 0.0
    %1356 = vmatprep.subr.mxu0 0.0
    %1357 = vmatpush1.msra.mxu0 0.0
    %1358 = vmatprep.subr.mxu0 0.0
    %1359 = vmatpush1.msra.mxu0 0.0
    %1360 = vmatprep.subr.mxu0 0.0
    %1361 = vmatpush1.msra.mxu0 0.0
    %1362 = vmatprep.subr.mxu0 0.0
    %1363 = vmatpush1.msra.mxu0 0.0
    %1364 = vmatprep.subr.mxu0 0.0
    %1365 = vmatpush1.msra.mxu0 0.0
    %1366 = vmatprep.subr.mxu0 0.0
    %1367 = vmatpush1.msra.mxu0 0.0
    %1368 = vmatprep.mubr.f32.mxu0 0.0
    %1369 = vmatmul.mubr.f32.gmra.mrb[0].mxu0 %v714
    %v1370 = vpop.f32.mrb[0].mxu0
    %v1371 = vadd.f32 0.0, %v1370
    %v1372 = vpop.f32.mrb[0].mxu0
    %1373 = vdwg.mxu0
    %1375 = vrot.lane.b32.xlu0 %v1231, 8
    %v1376 = vpop.permute.xlu0 %1375
    %1379 = vrot.lane.b32.xlu0 %v1301, 16
    %v1380 = vpop.permute.xlu0 %1379
    %1383 = vrot.lane.b32.xlu0 %v1371, 24
    %v1384 = vpop.permute.xlu0 %1383
    %v1386 = vsel %vm243, %v1161, %v1376
    %v1387 = vsel %vm799, %v1386, %v1380
    %v1388 = vsel %vm801, %v1387, %v1384
    %v1389 = vld [vmem:[#allocation7] sm:$0xff]
    %v1390 = vld [vmem:[#allocation7 + $0x8] sm:$0xff]
    %v1391 = vld [vmem:[#allocation7 + $0x10] sm:$0xff]
    %v1392 = vld [vmem:[#allocation7 + $0x18] sm:$0xff]
    %v1393 = vld [vmem:[%s4] sm:$0x1]
    %v1395 = vlaneseq
    %v1396 = vshrl.u32 %v1395, 7
    %v1397 = vsub.s32 0, %v1396
    %v1398 = vrot.slane %v1393, %v1397
    %v1401 = vsel %vm101, %v802, 0
    %v1404 = vsel %vm101, %v1388, 0
    %1406 = vmatprep.subr.mxu0 0.0
    %1407 = vmatpush1.msra.mxu0 %v1389
    %1408 = vmatprep.subr.mxu0 0.0
    %1409 = vmatpush1.msra.mxu0 %v1390
    %1410 = vmatprep.subr.mxu0 0.0
    %1411 = vmatpush1.msra.mxu0 %v1391
    %1412 = vmatprep.subr.mxu0 0.0
    %1413 = vmatpush1.msra.mxu0 %v1392
    %1414 = vmatprep.subr.mxu0 0.0
    %1415 = vmatpush1.msra.mxu0 0.0
    %1416 = vmatprep.subr.mxu0 0.0
    %1417 = vmatpush1.msra.mxu0 0.0
    %1418 = vmatprep.subr.mxu0 0.0
    %1419 = vmatpush1.msra.mxu0 0.0
    %1420 = vmatprep.subr.mxu0 0.0
    %1421 = vmatpush1.msra.mxu0 0.0
    %1422 = vmatprep.subr.mxu0 0.0
    %1423 = vmatpush1.msra.mxu0 0.0
    %1424 = vmatprep.subr.mxu0 0.0
    %1425 = vmatpush1.msra.mxu0 0.0
    %1426 = vmatprep.subr.mxu0 0.0
    %1427 = vmatpush1.msra.mxu0 0.0
    %1428 = vmatprep.subr.mxu0 0.0
    %1429 = vmatpush1.msra.mxu0 0.0
    %1430 = vmatprep.subr.mxu0 0.0
    %1431 = vmatpush1.msra.mxu0 0.0
    %1432 = vmatprep.subr.mxu0 0.0
    %1433 = vmatpush1.msra.mxu0 0.0
    %1434 = vmatprep.subr.mxu0 0.0
    %1435 = vmatpush1.msra.mxu0 0.0
    %1436 = vmatprep.subr.mxu0 0.0
    %1437 = vmatpush1.msra.mxu0 0.0
    %1438 = vmatprep.subr.mxu0 0.0
    %1439 = vmatpush1.msra.mxu0 0.0
    %1440 = vmatprep.subr.mxu0 0.0
    %1441 = vmatpush1.msra.mxu0 0.0
    %1442 = vmatprep.subr.mxu0 0.0
    %1443 = vmatpush1.msra.mxu0 0.0
    %1444 = vmatprep.subr.mxu0 0.0
    %1445 = vmatpush1.msra.mxu0 0.0
    %1446 = vmatprep.subr.mxu0 0.0
    %1447 = vmatpush1.msra.mxu0 0.0
    %1448 = vmatprep.subr.mxu0 0.0
    %1449 = vmatpush1.msra.mxu0 0.0
    %1450 = vmatprep.subr.mxu0 0.0
    %1451 = vmatpush1.msra.mxu0 0.0
    %1452 = vmatprep.subr.mxu0 0.0
    %1453 = vmatpush1.msra.mxu0 0.0
    %1454 = vmatprep.subr.mxu0 0.0
    %1455 = vmatpush1.msra.mxu0 0.0
    %1456 = vmatprep.subr.mxu0 0.0
    %1457 = vmatpush1.msra.mxu0 0.0
    %1458 = vmatprep.subr.mxu0 0.0
    %1459 = vmatpush1.msra.mxu0 0.0
    %1460 = vmatprep.subr.mxu0 0.0
    %1461 = vmatpush1.msra.mxu0 0.0
    %1462 = vmatprep.subr.mxu0 0.0
    %1463 = vmatpush1.msra.mxu0 0.0
    %1464 = vmatprep.subr.mxu0 0.0
    %1465 = vmatpush1.msra.mxu0 0.0
    %1466 = vmatprep.subr.mxu0 0.0
    %1467 = vmatpush1.msra.mxu0 0.0
    %1468 = vmatprep.subr.mxu0 0.0
    %1469 = vmatpush1.msra.mxu0 0.0
    %1470 = vmatprep.mubr.f32.mxu0 0.0
    %1471 = vmatmul.mubr.f32.gmra.mrb[0].mxu0 %v1401
    %v1472 = vpop.f32.mrb[0].mxu0
    %v1473 = vadd.f32 %v1398, %v1472
    %v1474 = vpop.f32.mrb[0].mxu0
    %1475 = vmatprep.mubr.f32.mxu0 0.0
    %1476 = vmatmul.mubr.f32.gmra.mrb[0].mxu0 %v1404
    %v1477 = vpop.f32.mrb[0].mxu0
    %v1478 = vadd.f32 %v1398, %v1477
    %v1479 = vpop.f32.mrb[0].mxu0
    %1480 = vdwg.mxu0
    %1481 = vst.msk [vmem:[#allocation11] sm:$0xff] %vm101, %v1473
    %1482 = vst.msk [vmem:[#allocation11 + $0x8] sm:$0xff] %vm101, %v1478
    // Predicated region
    $region50: #{multi_head_attention.1} parent=1 // pred_check
      _
    $region51: #{multi_head_attention.1} parent=1 // pred_check_branch
      %1484 = sbr.rel (0) target = $region53
    $region52: #{multi_head_attention.1} parent=1 // pred_region
      %s1486 = ssub.s32 256, 256
      %1487 = vsyncadd [#allocation4], %s1486
      %s1488 = sshll.u32 [#allocation11], 4
      %s1489 = int_to_ptr.vmem [resolvable:$true] %s1488
      %1494 = dma.vmem_to_hbm [thread:$0]  %s1489, 256, %s7, [#allocation4], 128, 128, 8
    $region53: #{multi_head_attention.1} parent=1 // pred_fallthru
      _
    // Predicated region
    $region54: #{multi_head_attention.1} parent=1 // pred_check
      _
    $region55: #{multi_head_attention.1} parent=1 // pred_check_branch
      %1496 = sbr.rel (0) target = $region57
    $region56: #{multi_head_attention.1} parent=1 // pred_region
      %1497 = dma.done [#allocation4], 256
    $region57: #{multi_head_attention.1} parent=1 // pred_fallthru
      _
    %1498 = vsyncpa [#allocation3], 1
    %1499 = vsyncpa [#allocation6], 1
    %1500 = vsyncpa [#allocation9], 1
    %1501 = vsyncpa [#allocation4], 1

</llo_original>
